<compile_context>
chip_gen: v5e
topology: v5e:2x2
jax: 0.10.0
libtpu: 0.0.40
codegen_flags: <defaults>
</compile_context>

<pallas_src>
import numpy as np
import jax
import jax.numpy as jnp
from jax.experimental import pallas as pl
from jax.experimental.pallas import tpu as pltpu


def _upsample_conv_kernel(x_ref, xt_ref, xb_ref, scale_ref, shift_ref,
                          w_ref, b_ref, o_ref):
    """Fused nearest-x2 (folded into weights) -> BN -> ReLU -> pad(1) -> 3x3 conv.

    Processes one (batch element, row block) tile at the ORIGINAL resolution.
    w_ref holds the phase-folded weights (3, 3, Cin, 4*Cout); each of the 9
    taps is one accumulating MXU matmul with K = Cin.
    """
    r = pl.program_id(1)
    nr = pl.num_programs(1)

    BH, W, Cin = x_ref.shape[1], x_ref.shape[2], x_ref.shape[3]
    C4 = o_ref.shape[3]                    # folded output channels = 4 * Cout

    scale = scale_ref[...].reshape(1, 1, Cin)
    shift = shift_ref[...].reshape(1, 1, Cin)

    def bn_relu(v):                        # BN (affine-folded) + ReLU on the VPU
        return jnp.maximum(v * scale + shift, 0.0)

    h = bn_relu(x_ref[0])                                       # (BH, W, Cin)
    # One-row halos above/below; zero at the image top/bottom boundary, which
    # is exactly the conv's zero padding (applied after ReLU in the module).
    h_top = jnp.where(r > 0, bn_relu(xt_ref[0]), 0.0)           # (1, W, Cin)
    h_bot = jnp.where(r < nr - 1, bn_relu(xb_ref[0]), 0.0)      # (1, W, Cin)

    # Halo-extended plane, flattened so (row, col) lives on the sublane axis.
    M = (BH + 2) * W
    hext = jnp.concatenate([h_top, h, h_bot], axis=0)           # (BH+2, W, Cin)
    hc = hext.reshape(M, Cin)
    col = jax.lax.broadcasted_iota(jnp.int32, (BH + 2, W, Cin), 1).reshape(M, Cin)

    # Column taps via XLU roll + boundary-column masks (no padded scratch
    # buffer, no sublane-offset ref slices).  Rolling the flattened plane only
    # wraps data into positions that the masks zero out.
    hl = jnp.where(col > 0, pltpu.roll(hc, 1, axis=0), 0.0)          # col j-1
    hr = jnp.where(col < W - 1, pltpu.roll(hc, M - 1, axis=0), 0.0)  # col j+1
    taps = (hl, hc, hr)                                              # dc = -1,0,+1

    Mo = BH * W
    acc = jnp.zeros((Mo, C4), jnp.float32)
    for dh in range(3):                    # row offset dr = dh - 1
        lo = dh * W
        for dc in range(3):                # col offset    = dc - 1
            acc = acc + jnp.dot(taps[dc][lo:lo + Mo], w_ref[dh, dc],
                                preferred_element_type=jnp.float32)
    out = acc + b_ref[...]                                           # (Mo, C4)

    # Free split-reshape (W % 8 friendly): minor dim stays the folded 4*Cout
    # channel axis, which is lane-dense (>=128) for realistic channel counts.
    o_ref[0] = out.reshape(BH, W, C4).astype(o_ref.dtype)


def _vmem_capacity_bytes():
    try:
        return int(pltpu.get_tpu_info().vmem_capacity_bytes)
    except Exception:
        return 64 << 20       # conservative fallback (v7x physical VMEM / core)


def _pick_row_block(H, W, Cin, Cout, budget_bytes, max_rows=64):
    """Largest divisor of H (<= max_rows) whose per-step footprint fits.

    Footprint counts double-buffered input/halo/output blocks, the folded
    weights, and a 2x safety factor on live in-kernel values (hext + rolled
    taps + accumulator), per the review's v7x caution.
    """
    C4 = 4 * Cout

    def fits(bh):
        fixed = (9 * Cin * C4 + C4 + 2 * Cin) * 4 * 2          # weights/bias/BN
        per_step = (2 * bh * W * Cin                           # input (dbl-buf)
                    + 4 * W * Cin                              # halos (dbl-buf)
                    + 2 * bh * W * C4) * 4                     # output (dbl-buf)
        live = (4 * (bh + 2) * W * Cin                         # hext + 3 taps
                + 2 * bh * W * C4) * 4                         # acc + store temp
        return fixed + per_step + 2 * live <= budget_bytes

    divs = [d for d in range(1, H + 1) if H % d == 0]
    cands = [d for d in divs if d <= max_rows and fits(d)]
    best = max(cands) if cands else 1
    # Awkward H (e.g. prime): fall back to untiled rows if that still fits.
    if best < 8 and fits(H):
        best = H
    return best


def upsample_forward(x_nchw, conv_w_oihw, conv_b, bn_gamma, bn_beta,
                     spatial_factor=2, eps=1e-5, max_block_rows=64):
    """Upsample.forward: nearest x2 -> BN -> ReLU -> pad(1) -> 3x3 conv (NCHW)."""
    assert spatial_factor == 2   # kernel specializes the module default factor
    N, Cin, H, W = x_nchw.shape
    Cout = conv_w_oihw.shape[0]
    C4 = 4 * Cout

    # NCHW -> NHWC on the small pre-upsample tensor only (channels on lanes).
    x_nhwc = jnp.transpose(x_nchw, (0, 2, 3, 1)).astype(jnp.float32)

    # BatchNorm2d training-mode batch statistics (biased variance) computed on
    # the PRE-upsample tensor: exact for nearest replication and 4x cheaper.
    mean = jnp.mean(x_nhwc, axis=(0, 1, 2))
    var = jnp.mean((x_nhwc - mean) ** 2, axis=(0, 1, 2))
    inv = bn_gamma.astype(jnp.float32) / jnp.sqrt(var + eps)
    scale = inv.reshape(1, Cin)
    shift = (bn_beta.astype(jnp.float32) - mean * inv).reshape(1, Cin)

    # Fold BOTH nearest-x2 phases (H and W) into the conv weights.
    # P[phase, source-offset idx (-1,0,+1), kernel tap] selects which original
    # kernel taps contribute at that phase/offset (derived from
    # y[2i+ph, 2j+pw] = sum K[dh,dw] * h_up[2i+ph+dh-1, 2j+pw+dw-1]).
    P = jnp.array([[[1., 0., 0.], [0., 1., 1.], [0., 0., 0.]],
                   [[0., 0., 0.], [1., 1., 0.], [0., 0., 1.]]], jnp.float32)
    Kt = jnp.transpose(conv_w_oihw.astype(jnp.float32), (2, 3, 1, 0))  # (dh,dw,Cin,Cout)
    w_fold = jnp.einsum('prh,qsw,hwco->rscpqo', P, P, Kt)   # (3,3,Cin,ph,pw,Cout)
    w_fold = w_fold.reshape(3, 3, Cin, C4)
    b_fold = jnp.tile(conv_b.astype(jnp.float32).reshape(1, Cout), (1, 4))  # (1,C4)

    # Generation-aware tiling + explicit scoped-VMEM limit.
    vmem_cap = _vmem_capacity_bytes()
    budget = max(16 << 20, int(vmem_cap * 0.40))   # ~51 MiB v5e/v6e, ~25 MiB v7x
    vmem_limit = max(32 << 20, min(int(vmem_cap * 0.70), 100 << 20))
    BH = _pick_row_block(H, W, Cin, Cout, budget, max_rows=max_block_rows)
    R = H // BH

    out4 = pl.pallas_call(
        _upsample_conv_kernel,
        out_shape=jax.ShapeDtypeStruct((N, H, W, C4), jnp.float32),
        grid=(N, R),
        in_specs=[
            # main input row block
            pl.BlockSpec((1, BH, W, Cin), lambda n, r: (n, r, 0, 0)),
            # 1-row halo above (clamped; masked to zero in-kernel when r == 0)
            pl.BlockSpec((1, 1, W, Cin),
                         lambda n, r: (n, jnp.maximum(r * BH - 1, 0), 0, 0)),
            # 1-row halo below (clamped; masked to zero when r == R-1)
            pl.BlockSpec((1, 1, W, Cin),
                         lambda n, r: (n, jnp.minimum((r + 1) * BH, H - 1), 0, 0)),
            pl.BlockSpec((1, Cin), lambda n, r: (0, 0)),              # BN scale
            pl.BlockSpec((1, Cin), lambda n, r: (0, 0)),              # BN shift
            pl.BlockSpec((3, 3, Cin, C4), lambda n, r: (0, 0, 0, 0)),  # folded W
            pl.BlockSpec((1, C4), lambda n, r: (0, 0)),                # folded b
        ],
        out_specs=pl.BlockSpec((1, BH, W, C4), lambda n, r: (n, r, 0, 0)),
        compiler_params=pltpu.CompilerParams(
            dimension_semantics=("parallel", "parallel"),
            vmem_limit_bytes=int(vmem_limit)),
    )(x_nhwc, x_nhwc, x_nhwc, scale, shift, w_fold, b_fold)

    # Un-fold the (ph, pw) phases.  The phase interleave is fused into the
    # single NHWC -> NCHW transpose required by the PyTorch interface anyway.
    out6 = out4.reshape(N, H, W, 2, 2, Cout)
    return jnp.transpose(out6, (0, 5, 1, 3, 2, 4)).reshape(N, Cout, 2 * H, 2 * W)


def reference_forward(x_nchw, conv_w_oihw, conv_b, bn_gamma, bn_beta,
                      spatial_factor=2, eps=1e-5):
    """Plain-JAX reference mirroring the PyTorch module."""
    x_up = jnp.repeat(jnp.repeat(x_nchw, spatial_factor, axis=2), spatial_factor, axis=3)
    mean = jnp.mean(x_up, axis=(0, 2, 3), keepdims=True)
    var = jnp.mean((x_up - mean) ** 2, axis=(0, 2, 3), keepdims=True)
    h = (x_up - mean) / jnp.sqrt(var + eps)
    h = h * bn_gamma.reshape(1, -1, 1, 1) + bn_beta.reshape(1, -1, 1, 1)
    h = jnp.maximum(h, 0.0)
    h = jnp.pad(h, ((0, 0), (0, 0), (1, 1), (1, 1)))
    y = jax.lax.conv_general_dilated(
        h, conv_w_oihw, window_strides=(1, 1), padding='VALID',
        dimension_numbers=('NCHW', 'OIHW', 'NCHW'))
    return y + conv_b.reshape(1, -1, 1, 1)


if __name__ == "__main__":
    key = jax.random.PRNGKey(0)
    k1, k2, k3 = jax.random.split(key, 3)

    N, Cin, Cout, H, W, ksz = 2, 4, 4, 16, 16, 3
    x = jax.random.normal(k1, (N, Cin, H, W), dtype=jnp.float32)

    # PyTorch Conv2d default init: U(-1/sqrt(fan_in), 1/sqrt(fan_in))
    fan_in = Cin * ksz * ksz
    bound = float(1.0 / np.sqrt(fan_in))
    conv_w = jax.random.uniform(k2, (Cout, Cin, ksz, ksz),
                                minval=-bound, maxval=bound, dtype=jnp.float32)
    conv_b = jax.random.uniform(k3, (Cout,), minval=-bound, maxval=bound,
                                dtype=jnp.float32)
    bn_gamma = jnp.ones((Cin,), jnp.float32)    # BatchNorm2d default weight
    bn_beta = jnp.zeros((Cin,), jnp.float32)    # BatchNorm2d default bias
    # TODO(synk): dropout layer is nn.Identity for dropout=0 (module default), so omitted.

    fwd = jax.jit(upsample_forward)
    out = jax.block_until_ready(fwd(x, conv_w, conv_b, bn_gamma, bn_beta))
    assert out.shape == (N, Cout, 2 * H, 2 * W), out.shape   # Upsample.check_spatial

    ref = reference_forward(x, conv_w, conv_b, bn_gamma, bn_beta)
    np.testing.assert_allclose(np.asarray(out), np.asarray(ref), rtol=1e-4, atol=2e-4)

    print("KERNEL_OK")
</pallas_src>

<mosaic_0001>
module attributes {stable_mosaic.version = 11 : i64} {
  func.func @_upsample_conv_kernel(%arg0: i32, %arg1: i32, %arg2: memref<1x16x16x4xf32, #tpu.memory_space<vmem>>, %arg3: memref<1x1x16x4xf32, #tpu.memory_space<vmem>>, %arg4: memref<1x1x16x4xf32, #tpu.memory_space<vmem>>, %arg5: memref<1x4xf32, #tpu.memory_space<vmem>>, %arg6: memref<1x4xf32, #tpu.memory_space<vmem>>, %arg7: memref<3x3x4x16xf32, #tpu.memory_space<vmem>>, %arg8: memref<1x16xf32, #tpu.memory_space<vmem>>, %arg9: memref<1x16x16x16xf32, #tpu.memory_space<vmem>>) attributes {dimension_semantics = [#tpu.dimension_semantics<parallel>, #tpu.dimension_semantics<parallel>], iteration_bounds = array<i64: 2, 1>, scalar_prefetch = 0 : i64, scratch_operands = 0 : i64, tpu.core_type = #tpu.core_type<tc>, window_params = [{transform_indices = @transform_0, window_bounds = array<i64: 1, 16, 16, 4>}, {transform_indices = @transform_1, window_bounds = array<i64: 1, 1, 16, 4>}, {transform_indices = @transform_2, window_bounds = array<i64: 1, 1, 16, 4>}, {pipeline_mode = #tpu.pipeline_mode<synchronous>, transform_indices = @transform_3, window_bounds = array<i64: 1, 4>}, {pipeline_mode = #tpu.pipeline_mode<synchronous>, transform_indices = @transform_4, window_bounds = array<i64: 1, 4>}, {pipeline_mode = #tpu.pipeline_mode<synchronous>, transform_indices = @transform_5, window_bounds = array<i64: 3, 3, 4, 16>}, {pipeline_mode = #tpu.pipeline_mode<synchronous>, transform_indices = @transform_6, window_bounds = array<i64: 1, 16>}, {transform_indices = @transform_7, window_bounds = array<i64: 1, 16, 16, 16>}]} {
    %c0 = arith.constant 0 : index
    %c0_0 = arith.constant 0 : index
    %0 = vector.load %arg5[%c0, %c0_0] : memref<1x4xf32, #tpu.memory_space<vmem>>, vector<1x4xf32>
    %1 = vector.shape_cast %0 : vector<1x4xf32> to vector<1x1x4xf32>
    %c0_1 = arith.constant 0 : index
    %c0_2 = arith.constant 0 : index
    %2 = vector.load %arg6[%c0_1, %c0_2] : memref<1x4xf32, #tpu.memory_space<vmem>>, vector<1x4xf32>
    %3 = vector.shape_cast %2 : vector<1x4xf32> to vector<1x1x4xf32>
    %c0_3 = arith.constant 0 : index
    %c0_4 = arith.constant 0 : index
    %c0_5 = arith.constant 0 : index
    %c0_6 = arith.constant 0 : index
    %4 = vector.load %arg2[%c0_3, %c0_4, %c0_5, %c0_6] : memref<1x16x16x4xf32, #tpu.memory_space<vmem>>, vector<1x16x16x4xf32>
    %5 = vector.shape_cast %4 : vector<1x16x16x4xf32> to vector<16x16x4xf32>
    %6 = vector.broadcast %1 : vector<1x1x4xf32> to vector<16x16x4xf32>
    %7 = arith.mulf %5, %6 : vector<16x16x4xf32>
    %8 = vector.broadcast %3 : vector<1x1x4xf32> to vector<16x16x4xf32>
    %9 = arith.addf %7, %8 : vector<16x16x4xf32>
    %cst = arith.constant 0.000000e+00 : f32
    %10 = vector.broadcast %cst : f32 to vector<16x16x4xf32>
    %11 = arith.maximumf %9, %10 : vector<16x16x4xf32>
    %c0_i32 = arith.constant 0 : i32
    %12 = arith.cmpi sgt, %arg1, %c0_i32 : i32
    %c0_7 = arith.constant 0 : index
    %c0_8 = arith.constant 0 : index
    %c0_9 = arith.constant 0 : index
    %c0_10 = arith.constant 0 : index
    %13 = vector.load %arg3[%c0_7, %c0_8, %c0_9, %c0_10] : memref<1x1x16x4xf32, #tpu.memory_space<vmem>>, vector<1x1x16x4xf32>
    %14 = vector.shape_cast %13 : vector<1x1x16x4xf32> to vector<1x16x4xf32>
    %15 = vector.broadcast %1 : vector<1x1x4xf32> to vector<1x16x4xf32>
    %16 = arith.mulf %14, %15 : vector<1x16x4xf32>
    %17 = vector.broadcast %3 : vector<1x1x4xf32> to vector<1x16x4xf32>
    %18 = arith.addf %16, %17 : vector<1x16x4xf32>
    %cst_11 = arith.constant 0.000000e+00 : f32
    %19 = vector.broadcast %cst_11 : f32 to vector<1x16x4xf32>
    %20 = arith.maximumf %18, %19 : vector<1x16x4xf32>
    %cst_12 = arith.constant 0.000000e+00 : f32
    %21 = vector.broadcast %cst_12 : f32 to vector<1x16x4xf32>
    %22 = arith.select %12, %20, %21 : vector<1x16x4xf32>
    %c0_i32_13 = arith.constant 0 : i32
    %23 = arith.cmpi slt, %arg1, %c0_i32_13 : i32
    %c0_14 = arith.constant 0 : index
    %c0_15 = arith.constant 0 : index
    %c0_16 = arith.constant 0 : index
    %c0_17 = arith.constant 0 : index
    %24 = vector.load %arg4[%c0_14, %c0_15, %c0_16, %c0_17] : memref<1x1x16x4xf32, #tpu.memory_space<vmem>>, vector<1x1x16x4xf32>
    %25 = vector.shape_cast %24 : vector<1x1x16x4xf32> to vector<1x16x4xf32>
    %26 = vector.broadcast %1 : vector<1x1x4xf32> to vector<1x16x4xf32>
    %27 = arith.mulf %25, %26 : vector<1x16x4xf32>
    %28 = vector.broadcast %3 : vector<1x1x4xf32> to vector<1x16x4xf32>
    %29 = arith.addf %27, %28 : vector<1x16x4xf32>
    %cst_18 = arith.constant 0.000000e+00 : f32
    %30 = vector.broadcast %cst_18 : f32 to vector<1x16x4xf32>
    %31 = arith.maximumf %29, %30 : vector<1x16x4xf32>
    %cst_19 = arith.constant 0.000000e+00 : f32
    %32 = vector.broadcast %cst_19 : f32 to vector<1x16x4xf32>
    %33 = arith.select %23, %31, %32 : vector<1x16x4xf32>
    %34 = tpu.concatenate %22, %11, %33 in 0 : vector<1x16x4xf32>, vector<16x16x4xf32>, vector<1x16x4xf32> -> vector<18x16x4xf32>
    %35 = vector.shape_cast %34 : vector<18x16x4xf32> to vector<288x4xf32>
    %36 = tpu.iota {dimensions = array<i32: 1>} : vector<18x16x4xi32>
    %37 = vector.shape_cast %36 : vector<18x16x4xi32> to vector<288x4xi32>
    %c0_i32_20 = arith.constant 0 : i32
    %38 = vector.broadcast %c0_i32_20 : i32 to vector<288x4xi32>
    %39 = arith.cmpi sgt, %37, %38 : vector<288x4xi32>
    %c1_i32 = arith.constant 1 : i32
    %40 = tpu.dynamic_rotate %35 by %c1_i32 dim 0 : vector<288x4xf32>, i32 -> vector<288x4xf32>
    %cst_21 = arith.constant 0.000000e+00 : f32
    %41 = vector.broadcast %cst_21 : f32 to vector<288x4xf32>
    %42 = arith.select %39, %40, %41 : vector<288x4xi1>, vector<288x4xf32>
    %c15_i32 = arith.constant 15 : i32
    %43 = vector.broadcast %c15_i32 : i32 to vector<288x4xi32>
    %44 = arith.cmpi slt, %37, %43 : vector<288x4xi32>
    %c287_i32 = arith.constant 287 : i32
    %45 = tpu.dynamic_rotate %35 by %c287_i32 dim 0 : vector<288x4xf32>, i32 -> vector<288x4xf32>
    %cst_22 = arith.constant 0.000000e+00 : f32
    %46 = vector.broadcast %cst_22 : f32 to vector<288x4xf32>
    %47 = arith.select %44, %45, %46 : vector<288x4xi1>, vector<288x4xf32>
    %cst_23 = arith.constant 0.000000e+00 : f32
    %48 = vector.broadcast %cst_23 : f32 to vector<256x16xf32>
    %49 = vector.extract_strided_slice %42 {offsets = [0, 0], sizes = [256, 4], strides = [1, 1]} : vector<288x4xf32> to vector<256x4xf32>
    %c0_24 = arith.constant 0 : index
    %c0_25 = arith.constant 0 : index
    %c0_26 = arith.constant 0 : index
    %c0_27 = arith.constant 0 : index
    %50 = vector.load %arg7[%c0_24, %c0_25, %c0_26, %c0_27] : memref<3x3x4x16xf32, #tpu.memory_space<vmem>>, vector<1x1x4x16xf32>
    %51 = vector.shape_cast %50 : vector<1x1x4x16xf32> to vector<4x16xf32>
    %cst_28 = arith.constant dense<0.000000e+00> : vector<256x16xf32>
    %52 = tpu.matmul %49, %51, %cst_28 {dimension_numbers = #tpu.dot_dimension_numbers<[1], [0], [0], [1], [0, 0, 1, 1], [], []>} : vector<256x4xf32>, vector<4x16xf32>, vector<256x16xf32> -> vector<256x16xf32>
    %53 = arith.addf %48, %52 : vector<256x16xf32>
    %54 = vector.extract_strided_slice %35 {offsets = [0, 0], sizes = [256, 4], strides = [1, 1]} : vector<288x4xf32> to vector<256x4xf32>
    %c0_29 = arith.constant 0 : index
    %c1 = arith.constant 1 : index
    %c0_30 = arith.constant 0 : index
    %c0_31 = arith.constant 0 : index
    %55 = vector.load %arg7[%c0_29, %c1, %c0_30, %c0_31] : memref<3x3x4x16xf32, #tpu.memory_space<vmem>>, vector<1x1x4x16xf32>
    %56 = vector.shape_cast %55 : vector<1x1x4x16xf32> to vector<4x16xf32>
    %cst_32 = arith.constant dense<0.000000e+00> : vector<256x16xf32>
    %57 = tpu.matmul %54, %56, %cst_32 {dimension_numbers = #tpu.dot_dimension_numbers<[1], [0], [0], [1], [0, 0, 1, 1], [], []>} : vector<256x4xf32>, vector<4x16xf32>, vector<256x16xf32> -> vector<256x16xf32>
    %58 = arith.addf %53, %57 : vector<256x16xf32>
    %59 = vector.extract_strided_slice %47 {offsets = [0, 0], sizes = [256, 4], strides = [1, 1]} : vector<288x4xf32> to vector<256x4xf32>
    %c0_33 = arith.constant 0 : index
    %c2 = arith.constant 2 : index
    %c0_34 = arith.constant 0 : index
    %c0_35 = arith.constant 0 : index
    %60 = vector.load %arg7[%c0_33, %c2, %c0_34, %c0_35] : memref<3x3x4x16xf32, #tpu.memory_space<vmem>>, vector<1x1x4x16xf32>
    %61 = vector.shape_cast %60 : vector<1x1x4x16xf32> to vector<4x16xf32>
    %cst_36 = arith.constant dense<0.000000e+00> : vector<256x16xf32>
    %62 = tpu.matmul %59, %61, %cst_36 {dimension_numbers = #tpu.dot_dimension_numbers<[1], [0], [0], [1], [0, 0, 1, 1], [], []>} : vector<256x4xf32>, vector<4x16xf32>, vector<256x16xf32> -> vector<256x16xf32>
    %63 = arith.addf %58, %62 : vector<256x16xf32>
    %64 = vector.extract_strided_slice %42 {offsets = [16, 0], sizes = [256, 4], strides = [1, 1]} : vector<288x4xf32> to vector<256x4xf32>
    %c1_37 = arith.constant 1 : index
    %c0_38 = arith.constant 0 : index
    %c0_39 = arith.constant 0 : index
    %c0_40 = arith.constant 0 : index
    %65 = vector.load %arg7[%c1_37, %c0_38, %c0_39, %c0_40] : memref<3x3x4x16xf32, #tpu.memory_space<vmem>>, vector<1x1x4x16xf32>
    %66 = vector.shape_cast %65 : vector<1x1x4x16xf32> to vector<4x16xf32>
    %cst_41 = arith.constant dense<0.000000e+00> : vector<256x16xf32>
    %67 = tpu.matmul %64, %66, %cst_41 {dimension_numbers = #tpu.dot_dimension_numbers<[1], [0], [0], [1], [0, 0, 1, 1], [], []>} : vector<256x4xf32>, vector<4x16xf32>, vector<256x16xf32> -> vector<256x16xf32>
    %68 = arith.addf %63, %67 : vector<256x16xf32>
    %69 = vector.extract_strided_slice %35 {offsets = [16, 0], sizes = [256, 4], strides = [1, 1]} : vector<288x4xf32> to vector<256x4xf32>
    %c1_42 = arith.constant 1 : index
    %c1_43 = arith.constant 1 : index
    %c0_44 = arith.constant 0 : index
    %c0_45 = arith.constant 0 : index
    %70 = vector.load %arg7[%c1_42, %c1_43, %c0_44, %c0_45] : memref<3x3x4x16xf32, #tpu.memory_space<vmem>>, vector<1x1x4x16xf32>
    %71 = vector.shape_cast %70 : vector<1x1x4x16xf32> to vector<4x16xf32>
    %cst_46 = arith.constant dense<0.000000e+00> : vector<256x16xf32>
    %72 = tpu.matmul %69, %71, %cst_46 {dimension_numbers = #tpu.dot_dimension_numbers<[1], [0], [0], [1], [0, 0, 1, 1], [], []>} : vector<256x4xf32>, vector<4x16xf32>, vector<256x16xf32> -> vector<256x16xf32>
    %73 = arith.addf %68, %72 : vector<256x16xf32>
    %74 = vector.extract_strided_slice %47 {offsets = [16, 0], sizes = [256, 4], strides = [1, 1]} : vector<288x4xf32> to vector<256x4xf32>
    %c1_47 = arith.constant 1 : index
    %c2_48 = arith.constant 2 : index
    %c0_49 = arith.constant 0 : index
    %c0_50 = arith.constant 0 : index
    %75 = vector.load %arg7[%c1_47, %c2_48, %c0_49, %c0_50] : memref<3x3x4x16xf32, #tpu.memory_space<vmem>>, vector<1x1x4x16xf32>
    %76 = vector.shape_cast %75 : vector<1x1x4x16xf32> to vector<4x16xf32>
    %cst_51 = arith.constant dense<0.000000e+00> : vector<256x16xf32>
    %77 = tpu.matmul %74, %76, %cst_51 {dimension_numbers = #tpu.dot_dimension_numbers<[1], [0], [0], [1], [0, 0, 1, 1], [], []>} : vector<256x4xf32>, vector<4x16xf32>, vector<256x16xf32> -> vector<256x16xf32>
    %78 = arith.addf %73, %77 : vector<256x16xf32>
    %79 = vector.extract_strided_slice %42 {offsets = [32, 0], sizes = [256, 4], strides = [1, 1]} : vector<288x4xf32> to vector<256x4xf32>
    %c2_52 = arith.constant 2 : index
    %c0_53 = arith.constant 0 : index
    %c0_54 = arith.constant 0 : index
    %c0_55 = arith.constant 0 : index
    %80 = vector.load %arg7[%c2_52, %c0_53, %c0_54, %c0_55] : memref<3x3x4x16xf32, #tpu.memory_space<vmem>>, vector<1x1x4x16xf32>
    %81 = vector.shape_cast %80 : vector<1x1x4x16xf32> to vector<4x16xf32>
    %cst_56 = arith.constant dense<0.000000e+00> : vector<256x16xf32>
    %82 = tpu.matmul %79, %81, %cst_56 {dimension_numbers = #tpu.dot_dimension_numbers<[1], [0], [0], [1], [0, 0, 1, 1], [], []>} : vector<256x4xf32>, vector<4x16xf32>, vector<256x16xf32> -> vector<256x16xf32>
    %83 = arith.addf %78, %82 : vector<256x16xf32>
    %84 = vector.extract_strided_slice %35 {offsets = [32, 0], sizes = [256, 4], strides = [1, 1]} : vector<288x4xf32> to vector<256x4xf32>
    %c2_57 = arith.constant 2 : index
    %c1_58 = arith.constant 1 : index
    %c0_59 = arith.constant 0 : index
    %c0_60 = arith.constant 0 : index
    %85 = vector.load %arg7[%c2_57, %c1_58, %c0_59, %c0_60] : memref<3x3x4x16xf32, #tpu.memory_space<vmem>>, vector<1x1x4x16xf32>
    %86 = vector.shape_cast %85 : vector<1x1x4x16xf32> to vector<4x16xf32>
    %cst_61 = arith.constant dense<0.000000e+00> : vector<256x16xf32>
    %87 = tpu.matmul %84, %86, %cst_61 {dimension_numbers = #tpu.dot_dimension_numbers<[1], [0], [0], [1], [0, 0, 1, 1], [], []>} : vector<256x4xf32>, vector<4x16xf32>, vector<256x16xf32> -> vector<256x16xf32>
    %88 = arith.addf %83, %87 : vector<256x16xf32>
    %89 = vector.extract_strided_slice %47 {offsets = [32, 0], sizes = [256, 4], strides = [1, 1]} : vector<288x4xf32> to vector<256x4xf32>
    %c2_62 = arith.constant 2 : index
    %c2_63 = arith.constant 2 : index
    %c0_64 = arith.constant 0 : index
    %c0_65 = arith.constant 0 : index
    %90 = vector.load %arg7[%c2_62, %c2_63, %c0_64, %c0_65] : memref<3x3x4x16xf32, #tpu.memory_space<vmem>>, vector<1x1x4x16xf32>
    %91 = vector.shape_cast %90 : vector<1x1x4x16xf32> to vector<4x16xf32>
    %cst_66 = arith.constant dense<0.000000e+00> : vector<256x16xf32>
    %92 = tpu.matmul %89, %91, %cst_66 {dimension_numbers = #tpu.dot_dimension_numbers<[1], [0], [0], [1], [0, 0, 1, 1], [], []>} : vector<256x4xf32>, vector<4x16xf32>, vector<256x16xf32> -> vector<256x16xf32>
    %93 = arith.addf %88, %92 : vector<256x16xf32>
    %c0_67 = arith.constant 0 : index
    %c0_68 = arith.constant 0 : index
    %94 = vector.load %arg8[%c0_67, %c0_68] : memref<1x16xf32, #tpu.memory_space<vmem>>, vector<1x16xf32>
    %95 = vector.broadcast %94 : vector<1x16xf32> to vector<256x16xf32>
    %96 = arith.addf %93, %95 : vector<256x16xf32>
    %97 = vector.shape_cast %96 : vector<256x16xf32> to vector<16x16x16xf32>
    %c0_69 = arith.constant 0 : index
    %c0_70 = arith.constant 0 : index
    %c0_71 = arith.constant 0 : index
    %c0_72 = arith.constant 0 : index
    %98 = vector.load %arg9[%c0_69, %c0_70, %c0_71, %c0_72] : memref<1x16x16x16xf32, #tpu.memory_space<vmem>>, vector<1x16x16x16xf32>
    %99 = vector.shape_cast %98 : vector<1x16x16x16xf32> to vector<16x16x16xf32>
    %100 = vector.shape_cast %97 : vector<16x16x16xf32> to vector<1x16x16x16xf32>
    tpu.vector_store %arg9[%c0_69, %c0_70, %c0_71, %c0_72], %100 {strides = array<i32>} : memref<1x16x16x16xf32, #tpu.memory_space<vmem>>, vector<1x16x16x16xf32>,
    return
  }
  func.func @transform_0(%arg0: i32, %arg1: i32) -> (i32, i32, i32, i32) {
    %c0_i32 = arith.constant 0 : i32
    %c0_i32_0 = arith.constant 0 : i32
    %c0_i32_1 = arith.constant 0 : i32
    return %arg0, %arg1, %c0_i32, %c0_i32_0 : i32, i32, i32, i32
  }
  func.func @transform_1(%arg0: i32, %arg1: i32) -> (i32, i32, i32, i32) {
    %c16_i32 = arith.constant 16 : i32
    %0 = arith.muli %arg1, %c16_i32 : i32
    %c1_i32 = arith.constant 1 : i32
    %1 = arith.subi %0, %c1_i32 : i32
    %c0_i32 = arith.constant 0 : i32
    %2 = arith.maxsi %1, %c0_i32 : i32
    %c0_i32_0 = arith.constant 0 : i32
    %c0_i32_1 = arith.constant 0 : i32
    %c0_i32_2 = arith.constant 0 : i32
    return %arg0, %2, %c0_i32_0, %c0_i32_1 : i32, i32, i32, i32
  }
  func.func @transform_2(%arg0: i32, %arg1: i32) -> (i32, i32, i32, i32) {
    %c1_i32 = arith.constant 1 : i32
    %0 = arith.addi %arg1, %c1_i32 : i32
    %c16_i32 = arith.constant 16 : i32
    %1 = arith.muli %0, %c16_i32 : i32
    %c15_i32 = arith.constant 15 : i32
    %2 = arith.minsi %1, %c15_i32 : i32
    %c0_i32 = arith.constant 0 : i32
    %c0_i32_0 = arith.constant 0 : i32
    %c0_i32_1 = arith.constant 0 : i32
    return %arg0, %2, %c0_i32, %c0_i32_0 : i32, i32, i32, i32
  }
  func.func @transform_3(%arg0: i32, %arg1: i32) -> (i32, i32) {
    %c0_i32 = arith.constant 0 : i32
    %c0_i32_0 = arith.constant 0 : i32
    %c0_i32_1 = arith.constant 0 : i32
    return %c0_i32, %c0_i32_0 : i32, i32
  }
  func.func @transform_4(%arg0: i32, %arg1: i32) -> (i32, i32) {
    %c0_i32 = arith.constant 0 : i32
    %c0_i32_0 = arith.constant 0 : i32
    %c0_i32_1 = arith.constant 0 : i32
    return %c0_i32, %c0_i32_0 : i32, i32
  }
  func.func @transform_5(%arg0: i32, %arg1: i32) -> (i32, i32, i32, i32) {
    %c0_i32 = arith.constant 0 : i32
    %c0_i32_0 = arith.constant 0 : i32
    %c0_i32_1 = arith.constant 0 : i32
    %c0_i32_2 = arith.constant 0 : i32
    %c0_i32_3 = arith.constant 0 : i32
    return %c0_i32, %c0_i32_0, %c0_i32_1, %c0_i32_2 : i32, i32, i32, i32
  }
  func.func @transform_6(%arg0: i32, %arg1: i32) -> (i32, i32) {
    %c0_i32 = arith.constant 0 : i32
    %c0_i32_0 = arith.constant 0 : i32
    %c0_i32_1 = arith.constant 0 : i32
    return %c0_i32, %c0_i32_0 : i32, i32
  }
  func.func @transform_7(%arg0: i32, %arg1: i32) -> (i32, i32, i32, i32) {
    %c0_i32 = arith.constant 0 : i32
    %c0_i32_0 = arith.constant 0 : i32
    %c0_i32_1 = arith.constant 0 : i32
    return %arg0, %arg1, %c0_i32, %c0_i32_0 : i32, i32, i32, i32
  }
}

</mosaic_0001>

<llo_original>
// kernel: upsample_forward.1
$region0: #{upsample_forward.1}
  #allocation0 [shape = 'u32[]', space=smem, size = 0x4, offset = 0x4, fixed_abs, tag = 'smem constant byte address 0x4 - core index']
  #allocation1 [shape = 'u32[72,128]{1,0:T(1,128)}', space=vmem, size = 0x9000, scoped, tag = 'internal scratch']
  %s0 = inlined_call_operand.vmem [shape: f32[2,16,16,4], index: 0, kind: input, shape index: {}, may-alias: {0,1,2}]
  %s1 = inlined_call_operand.vmem [shape: f32[2,16,16,4], index: 1, kind: input, shape index: {}, may-alias: {0,1,2}]
  %s2 = inlined_call_operand.vmem [shape: f32[2,16,16,4], index: 2, kind: input, shape index: {}, may-alias: {0,1,2}]
  %s3 = inlined_call_operand.vmem [shape: f32[1,4], index: 3, kind: input, shape index: {}]
  %s4 = inlined_call_operand.vmem [shape: f32[1,4], index: 4, kind: input, shape index: {}]
  %s5 = inlined_call_operand.vmem [shape: f32[3,3,4,16], index: 5, kind: input, shape index: {}]
  %s6 = inlined_call_operand.vmem [shape: f32[1,16], index: 6, kind: input, shape index: {}]
  %s7 = inlined_call_operand.vmem [shape: f32[2,16,16,16], index: 7, kind: output, shape index: {}]
  %s8 = sld [smem:[#allocation0]]
  $region61: #{upsample_forward.1} parent=0
    _
  %s10 = ssub.s32 1, %s8
  %s11 = scalar_select 0, %s10, %s8
  loop: start=0, step=1, limit=4
  $region2: #{upsample_forward.1} parent=0 // loop_pre_header
    _
  $region3: #{upsample_forward.1} parent=0 // loop_header
    %s13 = sphi 0, %s17
    %p14 = scmp.ge.s32.totalorder %s13, 4
    %s20 = sphi 0, %s32
    %s21 = sphi 0, %s28
    %s22 = sphi 0, %s20
    %s23 = sphi 0, %s21
    %s24 = sphi 0, %s22
    %s25 = sphi 0, %s23
    %s37 = sphi 0, %s39
    %s40 = sphi 0, %s37
    %s41 = sphi 0, %s40
    %s57 = sphi 0, %s41
    %s73 = sphi 0, %s75
    %s76 = sphi 0, %s73
    %s77 = sphi 0, %s76
    %s93 = sphi 0, %s77
    %s109 = sphi 0, %s111
    %s112 = sphi 0, %s109
    %s113 = sphi 0, %s112
    %s129 = sphi 0, %s113
    %s133 = sphi 0, %s133
    %s135 = sphi 0, %s133
    %s136 = sphi 0, %s135
    %s150 = sphi 0, %s136
    %s154 = sphi 0, %s154
    %s156 = sphi 0, %s154
    %s157 = sphi 0, %s156
    %s171 = sphi 0, %s157
    %s175 = sphi 0, %s175
    %s177 = sphi 0, %s175
    %s178 = sphi 0, %s177
    %s192 = sphi 0, %s178
    %s196 = sphi 0, %s196
    %s198 = sphi 0, %s196
    %s199 = sphi 0, %s198
    %s213 = sphi 0, %s199
    %s221 = sphi 0, %s223
    %s224 = sphi 0, %s221
    %s225 = sphi 0, %s224
    %s241 = sphi 0, %s225
  $region4: #{upsample_forward.1} parent=0 // loop_header_branch
    %16 = sbr.rel (%p14) target = $region8
  $region5: #{upsample_forward.1} parent=0 // loop_body
    %s18 = ssub.s32 %s13, 1
    %s19 = ssub.s32 %s13, 2
    %s26 = sadd.s32 1, %s21
    %p27 = scmp.ge.s32.totalorder %s26, 1
    %s28 = scalar_select %p27, 0, %s26
    %s29 = sadd.s32 1, %s20
    %s30 = scalar_select %p27, %s29, %s20
    %p31 = scmp.ge.s32.totalorder %s30, 2
    %s32 = scalar_select %p31, 0, %s30
    %s33 = ssub.s32 %s20, %s32
    %s34 = ssub.s32 %s21, %s28
    %s35 = sor.u32 %s33, %s34
    %p36 = scmp.eq.s32.totalorder %s35, 0
    %s38 = sadd.s32 %s37, 1
    %s39 = scalar_select %p36, %s37, %s38
    %p42 = pneg %p36
    %p43 = scmp.eq.s32.totalorder %s13, 1
    %p44 = por %p42, %p43
    %p45 = scmp.ne.s32.totalorder %s37, %s40
    %p46 = scmp.eq.s32.totalorder %s13, 0
    %p47 = por %p45, %p46
    %p48 = scmp.ne.s32.totalorder %s37, %s40
    %p49 = scmp.eq.s32.totalorder %s18, 1
    %p50 = por %p48, %p49
    %p51 = scmp.ne.s32.totalorder %s40, %s41
    %p52 = scmp.eq.s32.totalorder %s18, 0
    %p53 = por %p51, %p52
    %p54 = scmp.ne.s32.totalorder %s40, %s41
    %p55 = scmp.eq.s32.totalorder %s19, 1
    %p56 = por %p54, %p55
    %p58 = scmp.ne.s32.totalorder %s41, %s57
    %p59 = scmp.eq.s32.totalorder %s19, 0
    %p60 = por %p58, %p59
    %s61 = smul.u32 %s21, 16
    %s62 = ssub.s32 %s61, 1
    %p63 = scmp.gt.s32.totalorder %s62, 0
    %s64 = scalar_select %p63, %s62, 0
    %s65 = smul.u32 %s28, 16
    %s66 = ssub.s32 %s65, 1
    %p67 = scmp.gt.s32.totalorder %s66, 0
    %s68 = scalar_select %p67, %s66, 0
    %s69 = ssub.s32 %s20, %s32
    %s70 = ssub.s32 %s64, %s68
    %s71 = sor.u32 %s69, %s70
    %p72 = scmp.eq.s32.totalorder %s71, 0
    %s74 = sadd.s32 %s73, 1
    %s75 = scalar_select %p72, %s73, %s74
    %p78 = pneg %p72
    %p79 = scmp.eq.s32.totalorder %s13, 1
    %p80 = por %p78, %p79
    %p81 = scmp.ne.s32.totalorder %s73, %s76
    %p82 = scmp.eq.s32.totalorder %s13, 0
    %p83 = por %p81, %p82
    %p84 = scmp.ne.s32.totalorder %s73, %s76
    %p85 = scmp.eq.s32.totalorder %s18, 1
    %p86 = por %p84, %p85
    %p87 = scmp.ne.s32.totalorder %s76, %s77
    %p88 = scmp.eq.s32.totalorder %s18, 0
    %p89 = por %p87, %p88
    %p90 = scmp.ne.s32.totalorder %s76, %s77
    %p91 = scmp.eq.s32.totalorder %s19, 1
    %p92 = por %p90, %p91
    %p94 = scmp.ne.s32.totalorder %s77, %s93
    %p95 = scmp.eq.s32.totalorder %s19, 0
    %p96 = por %p94, %p95
    %s97 = sadd.s32 %s21, 1
    %s98 = smul.u32 %s97, 16
    %p99 = scmp.lt.s32.totalorder %s98, 15
    %s100 = scalar_select %p99, %s98, 15
    %s101 = sadd.s32 %s28, 1
    %s102 = smul.u32 %s101, 16
    %p103 = scmp.lt.s32.totalorder %s102, 15
    %s104 = scalar_select %p103, %s102, 15
    %s105 = ssub.s32 %s20, %s32
    %s106 = ssub.s32 %s100, %s104
    %s107 = sor.u32 %s105, %s106
    %p108 = scmp.eq.s32.totalorder %s107, 0
    %s110 = sadd.s32 %s109, 1
    %s111 = scalar_select %p108, %s109, %s110
    %p114 = pneg %p108
    %p115 = scmp.eq.s32.totalorder %s13, 1
    %p116 = por %p114, %p115
    %p117 = scmp.ne.s32.totalorder %s109, %s112
    %p118 = scmp.eq.s32.totalorder %s13, 0
    %p119 = por %p117, %p118
    %p120 = scmp.ne.s32.totalorder %s109, %s112
    %p121 = scmp.eq.s32.totalorder %s18, 1
    %p122 = por %p120, %p121
    %p123 = scmp.ne.s32.totalorder %s112, %s113
    %p124 = scmp.eq.s32.totalorder %s18, 0
    %p125 = por %p123, %p124
    %p126 = scmp.ne.s32.totalorder %s112, %s113
    %p127 = scmp.eq.s32.totalorder %s19, 1
    %p128 = por %p126, %p127
    %p130 = scmp.ne.s32.totalorder %s113, %s129
    %p131 = scmp.eq.s32.totalorder %s19, 0
    %p132 = por %p130, %p131
    %s134 = sadd.s32 %s133, 1
    %p137 = scmp.eq.s32.totalorder %s13, 1
    %p138 = scmp.ne.s32.totalorder %s133, %s135
    %p139 = scmp.eq.s32.totalorder %s13, 0
    %p140 = por %p138, %p139
    %p141 = scmp.ne.s32.totalorder %s133, %s135
    %p142 = scmp.eq.s32.totalorder %s18, 1
    %p143 = por %p141, %p142
    %p144 = scmp.ne.s32.totalorder %s135, %s136
    %p145 = scmp.eq.s32.totalorder %s18, 0
    %p146 = por %p144, %p145
    %p147 = scmp.ne.s32.totalorder %s135, %s136
    %p148 = scmp.eq.s32.totalorder %s19, 1
    %p149 = por %p147, %p148
    %p151 = scmp.ne.s32.totalorder %s136, %s150
    %p152 = scmp.eq.s32.totalorder %s19, 0
    %p153 = por %p151, %p152
    %s155 = sadd.s32 %s154, 1
    %p158 = scmp.eq.s32.totalorder %s13, 1
    %p159 = scmp.ne.s32.totalorder %s154, %s156
    %p160 = scmp.eq.s32.totalorder %s13, 0
    %p161 = por %p159, %p160
    %p162 = scmp.ne.s32.totalorder %s154, %s156
    %p163 = scmp.eq.s32.totalorder %s18, 1
    %p164 = por %p162, %p163
    %p165 = scmp.ne.s32.totalorder %s156, %s157
    %p166 = scmp.eq.s32.totalorder %s18, 0
    %p167 = por %p165, %p166
    %p168 = scmp.ne.s32.totalorder %s156, %s157
    %p169 = scmp.eq.s32.totalorder %s19, 1
    %p170 = por %p168, %p169
    %p172 = scmp.ne.s32.totalorder %s157, %s171
    %p173 = scmp.eq.s32.totalorder %s19, 0
    %p174 = por %p172, %p173
    %s176 = sadd.s32 %s175, 1
    %p179 = scmp.eq.s32.totalorder %s13, 1
    %p180 = scmp.ne.s32.totalorder %s175, %s177
    %p181 = scmp.eq.s32.totalorder %s13, 0
    %p182 = por %p180, %p181
    %p183 = scmp.ne.s32.totalorder %s175, %s177
    %p184 = scmp.eq.s32.totalorder %s18, 1
    %p185 = por %p183, %p184
    %p186 = scmp.ne.s32.totalorder %s177, %s178
    %p187 = scmp.eq.s32.totalorder %s18, 0
    %p188 = por %p186, %p187
    %p189 = scmp.ne.s32.totalorder %s177, %s178
    %p190 = scmp.eq.s32.totalorder %s19, 1
    %p191 = por %p189, %p190
    %p193 = scmp.ne.s32.totalorder %s178, %s192
    %p194 = scmp.eq.s32.totalorder %s19, 0
    %p195 = por %p193, %p194
    %s197 = sadd.s32 %s196, 1
    %p200 = scmp.eq.s32.totalorder %s13, 1
    %p201 = scmp.ne.s32.totalorder %s196, %s198
    %p202 = scmp.eq.s32.totalorder %s13, 0
    %p203 = por %p201, %p202
    %p204 = scmp.ne.s32.totalorder %s196, %s198
    %p205 = scmp.eq.s32.totalorder %s18, 1
    %p206 = por %p204, %p205
    %p207 = scmp.ne.s32.totalorder %s198, %s199
    %p208 = scmp.eq.s32.totalorder %s18, 0
    %p209 = por %p207, %p208
    %p210 = scmp.ne.s32.totalorder %s198, %s199
    %p211 = scmp.eq.s32.totalorder %s19, 1
    %p212 = por %p210, %p211
    %p214 = scmp.ne.s32.totalorder %s199, %s213
    %p215 = scmp.eq.s32.totalorder %s19, 0
    %p216 = por %p214, %p215
    %s217 = ssub.s32 %s20, %s32
    %s218 = ssub.s32 %s21, %s28
    %s219 = sor.u32 %s217, %s218
    %p220 = scmp.eq.s32.totalorder %s219, 0
    %s222 = sadd.s32 %s221, 1
    %s223 = scalar_select %p220, %s221, %s222
    %p226 = pneg %p220
    %p227 = scmp.eq.s32.totalorder %s13, 1
    %p228 = por %p226, %p227
    %p229 = scmp.ne.s32.totalorder %s221, %s224
    %p230 = scmp.eq.s32.totalorder %s13, 0
    %p231 = por %p229, %p230
    %p232 = scmp.ne.s32.totalorder %s221, %s224
    %p233 = scmp.eq.s32.totalorder %s18, 1
    %p234 = por %p232, %p233
    %p235 = scmp.ne.s32.totalorder %s224, %s225
    %p236 = scmp.eq.s32.totalorder %s18, 0
    %p237 = por %p235, %p236
    %p238 = scmp.ne.s32.totalorder %s224, %s225
    %p239 = scmp.eq.s32.totalorder %s19, 1
    %p240 = por %p238, %p239
    %p242 = scmp.ne.s32.totalorder %s225, %s241
    %p243 = scmp.eq.s32.totalorder %s19, 0
    %p244 = por %p242, %p243
    %p245 = scmp.le.s32.totalorder 1, %s13
    %p246 = scmp.lt.s32.totalorder %s13, 3
    %p247 = pnand %p245, %p246
    %p248 = pneg %p247
    // Predicated region
    $region9: #{upsample_forward.1} parent=5 // pred_check
      _
    $region10: #{upsample_forward.1} parent=5 // pred_check_branch
      %250 = sbr.rel (%p247) target = $region12
    $region11: #{upsample_forward.1} parent=5 // pred_region
      %s251 = ssub.s32 %s13, 1
      // Predicated region
      $region13: #{upsample_forward.1} parent=11 // pred_check
        %p252 = pneg %p146
      $region14: #{upsample_forward.1} parent=11 // pred_check_branch
        %254 = sbr.rel (%p252) target = $region16
      $region15: #{upsample_forward.1} parent=11 // pred_region
        _
      $region16: #{upsample_forward.1} parent=11 // pred_fallthru
        _
      // Predicated region
      $region17: #{upsample_forward.1} parent=11 // pred_check
        %p255 = pneg %p167
      $region18: #{upsample_forward.1} parent=11 // pred_check_branch
        %257 = sbr.rel (%p255) target = $region20
      $region19: #{upsample_forward.1} parent=11 // pred_region
        _
      $region20: #{upsample_forward.1} parent=11 // pred_fallthru
        _
      // Predicated region
      $region21: #{upsample_forward.1} parent=11 // pred_check
        %p258 = pneg %p188
      $region22: #{upsample_forward.1} parent=11 // pred_check_branch
        %260 = sbr.rel (%p258) target = $region24
      $region23: #{upsample_forward.1} parent=11 // pred_region
        _
      $region24: #{upsample_forward.1} parent=11 // pred_fallthru
        _
      // Predicated region
      $region25: #{upsample_forward.1} parent=11 // pred_check
        %p261 = pneg %p209
      $region26: #{upsample_forward.1} parent=11 // pred_check_branch
        %263 = sbr.rel (%p261) target = $region28
      $region27: #{upsample_forward.1} parent=11 // pred_region
        _
      $region28: #{upsample_forward.1} parent=11 // pred_fallthru
        _
    $region12: #{upsample_forward.1} parent=5 // pred_fallthru
      _
    %p264 = scmp.lt.s32.totalorder %s13, 2
    // Predicated region
    $region29: #{upsample_forward.1} parent=5 // pred_check
      %p265 = pneg %p264
    $region30: #{upsample_forward.1} parent=5 // pred_check_branch
      %267 = sbr.rel (%p265) target = $region32
    $region31: #{upsample_forward.1} parent=5 // pred_region
      // Predicated region
      $region33: #{upsample_forward.1} parent=31 // pred_check
        %p268 = pneg %p47
      $region34: #{upsample_forward.1} parent=31 // pred_check_branch
        %270 = sbr.rel (%p268) target = $region36
      $region35: #{upsample_forward.1} parent=31 // pred_region
        %s271 = smul.u32 16, %s21
        %p272 = scmp.lt.s32.totalorder %s20, 1
        %s273 = scalar_select %p272, %s20, 1
        %p274 = scmp.lt.s32.totalorder %s271, 15
        %s275 = scalar_select %p274, %s271, 15
        %s276 = smul.addr %s275, 2
        %s277 = smul.addr %s273, 32
        %s278 = sadd.s32 %s276, %s277
        %s279 = smul.addr %s278, 8
        %s280 = scalar_lea.vmem %s0, %s279
        %s281 = smul.u32 16, %s21
      $region36: #{upsample_forward.1} parent=31 // pred_fallthru
        _
      // Predicated region
      $region37: #{upsample_forward.1} parent=31 // pred_check
        %p282 = pneg %p83
      $region38: #{upsample_forward.1} parent=31 // pred_check_branch
        %284 = sbr.rel (%p282) target = $region40
      $region39: #{upsample_forward.1} parent=31 // pred_region
        %s285 = smul.u32 %s21, 16
        %s286 = ssub.s32 %s285, 1
        %p287 = scmp.gt.s32.totalorder %s286, 0
        %s288 = scalar_select %p287, %s286, 0
        %p289 = scmp.lt.s32.totalorder %s20, 1
        %s290 = scalar_select %p289, %s20, 1
        %p291 = scmp.lt.s32.totalorder %s288, 15
        %s292 = scalar_select %p291, %s288, 15
        %s293 = smul.addr %s292, 2
        %s294 = smul.addr %s290, 32
        %s295 = sadd.s32 %s293, %s294
        %s296 = smul.addr %s295, 8
        %s297 = scalar_lea.vmem %s1, %s296
        %s298 = smul.u32 %s21, 16
        %s299 = ssub.s32 %s298, 1
        %p300 = scmp.gt.s32.totalorder %s299, 0
        %s301 = scalar_select %p300, %s299, 0
      $region40: #{upsample_forward.1} parent=31 // pred_fallthru
        _
      // Predicated region
      $region41: #{upsample_forward.1} parent=31 // pred_check
        %p302 = pneg %p119
      $region42: #{upsample_forward.1} parent=31 // pred_check_branch
        %304 = sbr.rel (%p302) target = $region44
      $region43: #{upsample_forward.1} parent=31 // pred_region
        %s305 = sadd.s32 %s21, 1
        %s306 = smul.u32 %s305, 16
        %p307 = scmp.lt.s32.totalorder %s306, 15
        %s308 = scalar_select %p307, %s306, 15
        %p309 = scmp.lt.s32.totalorder %s20, 1
        %s310 = scalar_select %p309, %s20, 1
        %p311 = scmp.lt.s32.totalorder %s308, 15
        %s312 = scalar_select %p311, %s308, 15
        %s313 = smul.addr %s312, 2
        %s314 = smul.addr %s310, 32
        %s315 = sadd.s32 %s313, %s314
        %s316 = smul.addr %s315, 8
        %s317 = scalar_lea.vmem %s2, %s316
        %s318 = sadd.s32 %s21, 1
        %s319 = smul.u32 %s318, 16
        %p320 = scmp.lt.s32.totalorder %s319, 15
        %s321 = scalar_select %p320, %s319, 15
      $region44: #{upsample_forward.1} parent=31 // pred_fallthru
        _
    $region32: #{upsample_forward.1} parent=5 // pred_fallthru
      _
    %p322 = scmp.le.s32.totalorder 1, %s13
    %p323 = scmp.lt.s32.totalorder %s13, 3
    %p324 = pnand %p322, %p323
    %p325 = pneg %p324
    // Predicated region
    $region45: #{upsample_forward.1} parent=5 // pred_check
      _
    $region46: #{upsample_forward.1} parent=5 // pred_check_branch
      %327 = sbr.rel (%p324) target = $region48
    $region47: #{upsample_forward.1} parent=5 // pred_region
      %s328 = ssub.s32 %s13, 1
      %s329 = smul.u32 16, %s23
      %p330 = scmp.lt.s32.totalorder %s22, 1
      %s331 = scalar_select %p330, %s22, 1
      %p332 = scmp.lt.s32.totalorder %s329, 15
      %s333 = scalar_select %p332, %s329, 15
      %s334 = smul.addr %s333, 2
      %s335 = smul.addr %s331, 32
      %s336 = sadd.s32 %s334, %s335
      %s337 = smul.addr %s336, 8
      %s338 = scalar_lea.vmem %s0, %s337
      %p339 = pneg %p53
      %p340 = pneg %p50
      %s341 = smul.u32 %s23, 16
      %s342 = ssub.s32 %s341, 1
      %p343 = scmp.gt.s32.totalorder %s342, 0
      %s344 = scalar_select %p343, %s342, 0
      %p345 = scmp.lt.s32.totalorder %s22, 1
      %s346 = scalar_select %p345, %s22, 1
      %p347 = scmp.lt.s32.totalorder %s344, 15
      %s348 = scalar_select %p347, %s344, 15
      %s349 = smul.addr %s348, 2
      %s350 = smul.addr %s346, 32
      %s351 = sadd.s32 %s349, %s350
      %s352 = smul.addr %s351, 8
      %s353 = scalar_lea.vmem %s1, %s352
      %p354 = pneg %p89
      %p355 = pneg %p86
      %s356 = sadd.s32 %s23, 1
      %s357 = smul.u32 %s356, 16
      %p358 = scmp.lt.s32.totalorder %s357, 15
      %s359 = scalar_select %p358, %s357, 15
      %p360 = scmp.lt.s32.totalorder %s22, 1
      %s361 = scalar_select %p360, %s22, 1
      %p362 = scmp.lt.s32.totalorder %s359, 15
      %s363 = scalar_select %p362, %s359, 15
      %s364 = smul.addr %s363, 2
      %s365 = smul.addr %s361, 32
      %s366 = sadd.s32 %s364, %s365
      %s367 = smul.addr %s366, 8
      %s368 = scalar_lea.vmem %s2, %s367
      %p369 = pneg %p125
      %p370 = pneg %p122
      %p371 = pneg %p146
      %p372 = pneg %p143
      %p373 = pneg %p167
      %p374 = pneg %p164
      %p375 = pneg %p188
      %p376 = pneg %p185
      %p377 = pneg %p209
      %p378 = pneg %p206
      %p379 = pneg %p237
      %p380 = pneg %p234
      %s381 = smul.u32 16, %s23
      %p382 = scmp.lt.s32.totalorder %s22, 1
      %s383 = scalar_select %p382, %s22, 1
      %p384 = scmp.lt.s32.totalorder %s381, 15
      %s385 = scalar_select %p384, %s381, 15
      %s386 = smul.addr %s385, 2
      %s387 = smul.addr %s383, 32
      %s388 = sadd.s32 %s386, %s387
      %s389 = smul.addr %s388, 8
      %s390 = scalar_lea.vmem %s7, %s389
      %s391 = smul.u32 16, %s23
      %p392 = scmp.lt.s32.totalorder %s22, 1
      %s393 = scalar_select %p392, %s22, 1
      %p394 = scmp.lt.s32.totalorder %s391, 15
      %s395 = scalar_select %p394, %s391, 15
      %s396 = smul.addr %s395, 2
      %s397 = smul.addr %s393, 32
      %s398 = sadd.s32 %s396, %s397
      %s399 = smul.addr %s398, 8
      %s400 = scalar_lea.vmem %s0, %s399
      %s401 = smul.u32 16, %s23
      %s402 = smul.u32 %s23, 16
      %s403 = ssub.s32 %s402, 1
      %p404 = scmp.gt.s32.totalorder %s403, 0
      %s405 = scalar_select %p404, %s403, 0
      %p406 = scmp.lt.s32.totalorder %s22, 1
      %s407 = scalar_select %p406, %s22, 1
      %p408 = scmp.lt.s32.totalorder %s405, 15
      %s409 = scalar_select %p408, %s405, 15
      %s410 = smul.addr %s409, 2
      %s411 = smul.addr %s407, 32
      %s412 = sadd.s32 %s410, %s411
      %s413 = smul.addr %s412, 8
      %s414 = scalar_lea.vmem %s1, %s413
      %s415 = smul.u32 %s23, 16
      %s416 = ssub.s32 %s415, 1
      %p417 = scmp.gt.s32.totalorder %s416, 0
      %s418 = scalar_select %p417, %s416, 0
      %s419 = sadd.s32 %s23, 1
      %s420 = smul.u32 %s419, 16
      %p421 = scmp.lt.s32.totalorder %s420, 15
      %s422 = scalar_select %p421, %s420, 15
      %p423 = scmp.lt.s32.totalorder %s22, 1
      %s424 = scalar_select %p423, %s22, 1
      %p425 = scmp.lt.s32.totalorder %s422, 15
      %s426 = scalar_select %p425, %s422, 15
      %s427 = smul.addr %s426, 2
      %s428 = smul.addr %s424, 32
      %s429 = sadd.s32 %s427, %s428
      %s430 = smul.addr %s429, 8
      %s431 = scalar_lea.vmem %s2, %s430
      %s432 = sadd.s32 %s23, 1
      %s433 = smul.u32 %s432, 16
      %p434 = scmp.lt.s32.totalorder %s433, 15
      %s435 = scalar_select %p434, %s433, 15
      %s436 = smul.u32 16, %s23
      %p437 = scmp.lt.s32.totalorder %s22, 1
      %s438 = scalar_select %p437, %s22, 1
      %p439 = scmp.lt.s32.totalorder %s436, 15
      %s440 = scalar_select %p439, %s436, 15
      %s441 = smul.addr %s440, 2
      %s442 = smul.addr %s438, 32
      %s443 = sadd.s32 %s441, %s442
      %s444 = smul.addr %s443, 8
      %s445 = scalar_lea.vmem %s7, %s444
      %s446 = smul.u32 16, %s23
      %v447 = vld [vmem:[%s3] sm:$0x1]
      %v448 = vld [vmem:[%s4] sm:$0x1]
      %v449 = vld [vmem:[%s400] sm:$0xff]
      %v450 = vld [vmem:[%s400 + $0x8] sm:$0xff]
      %v451 = vld [vmem:[%s400 + $0x10] sm:$0xff]
      %v452 = vld [vmem:[%s400 + $0x18] sm:$0xff]
      %v453 = vld [vmem:[%s400 + $0x20] sm:$0xff]
      %v454 = vld [vmem:[%s400 + $0x28] sm:$0xff]
      %v455 = vld [vmem:[%s400 + $0x30] sm:$0xff]
      %v456 = vld [vmem:[%s400 + $0x38] sm:$0xff]
      %v457 = vld [vmem:[%s400 + $0x40] sm:$0xff]
      %v458 = vld [vmem:[%s400 + $0x48] sm:$0xff]
      %v459 = vld [vmem:[%s400 + $0x50] sm:$0xff]
      %v460 = vld [vmem:[%s400 + $0x58] sm:$0xff]
      %v461 = vld [vmem:[%s400 + $0x60] sm:$0xff]
      %v462 = vld [vmem:[%s400 + $0x68] sm:$0xff]
      %v463 = vld [vmem:[%s400 + $0x70] sm:$0xff]
      %v464 = vld [vmem:[%s400 + $0x78] sm:$0xff]
      %v465 = vld [vmem:[%s400 + $0x80] sm:$0xff]
      %v466 = vld [vmem:[%s400 + $0x88] sm:$0xff]
      %v467 = vld [vmem:[%s400 + $0x90] sm:$0xff]
      %v468 = vld [vmem:[%s400 + $0x98] sm:$0xff]
      %v469 = vld [vmem:[%s400 + $0xa0] sm:$0xff]
      %v470 = vld [vmem:[%s400 + $0xa8] sm:$0xff]
      %v471 = vld [vmem:[%s400 + $0xb0] sm:$0xff]
      %v472 = vld [vmem:[%s400 + $0xb8] sm:$0xff]
      %v473 = vld [vmem:[%s400 + $0xc0] sm:$0xff]
      %v474 = vld [vmem:[%s400 + $0xc8] sm:$0xff]
      %v475 = vld [vmem:[%s400 + $0xd0] sm:$0xff]
      %v476 = vld [vmem:[%s400 + $0xd8] sm:$0xff]
      %v477 = vld [vmem:[%s400 + $0xe0] sm:$0xff]
      %v478 = vld [vmem:[%s400 + $0xe8] sm:$0xff]
      %v479 = vld [vmem:[%s400 + $0xf0] sm:$0xff]
      %v480 = vld [vmem:[%s400 + $0xf8] sm:$0xff]
      %v482 = vperm.slane %v447, 0
      %v484 = vmul.f32 %v449, %v482
      %v485 = vmul.f32 %v450, %v482
      %v486 = vmul.f32 %v451, %v482
      %v487 = vmul.f32 %v452, %v482
      %v488 = vmul.f32 %v453, %v482
      %v489 = vmul.f32 %v454, %v482
      %v490 = vmul.f32 %v455, %v482
      %v491 = vmul.f32 %v456, %v482
      %v492 = vmul.f32 %v457, %v482
      %v493 = vmul.f32 %v458, %v482
      %v494 = vmul.f32 %v459, %v482
      %v495 = vmul.f32 %v460, %v482
      %v496 = vmul.f32 %v461, %v482
      %v497 = vmul.f32 %v462, %v482
      %v498 = vmul.f32 %v463, %v482
      %v499 = vmul.f32 %v464, %v482
      %v500 = vmul.f32 %v465, %v482
      %v501 = vmul.f32 %v466, %v482
      %v502 = vmul.f32 %v467, %v482
      %v503 = vmul.f32 %v468, %v482
      %v504 = vmul.f32 %v469, %v482
      %v505 = vmul.f32 %v470, %v482
      %v506 = vmul.f32 %v471, %v482
      %v507 = vmul.f32 %v472, %v482
      %v508 = vmul.f32 %v473, %v482
      %v509 = vmul.f32 %v474, %v482
      %v510 = vmul.f32 %v475, %v482
      %v511 = vmul.f32 %v476, %v482
      %v512 = vmul.f32 %v477, %v482
      %v513 = vmul.f32 %v478, %v482
      %v514 = vmul.f32 %v479, %v482
      %v515 = vmul.f32 %v480, %v482
      %v517 = vperm.slane %v448, 0
      %v519 = vadd.f32 %v484, %v517
      %v520 = vadd.f32 %v485, %v517
      %v521 = vadd.f32 %v486, %v517
      %v522 = vadd.f32 %v487, %v517
      %v523 = vadd.f32 %v488, %v517
      %v524 = vadd.f32 %v489, %v517
      %v525 = vadd.f32 %v490, %v517
      %v526 = vadd.f32 %v491, %v517
      %v527 = vadd.f32 %v492, %v517
      %v528 = vadd.f32 %v493, %v517
      %v529 = vadd.f32 %v494, %v517
      %v530 = vadd.f32 %v495, %v517
      %v531 = vadd.f32 %v496, %v517
      %v532 = vadd.f32 %v497, %v517
      %v533 = vadd.f32 %v498, %v517
      %v534 = vadd.f32 %v499, %v517
      %v535 = vadd.f32 %v500, %v517
      %v536 = vadd.f32 %v501, %v517
      %v537 = vadd.f32 %v502, %v517
      %v538 = vadd.f32 %v503, %v517
      %v539 = vadd.f32 %v504, %v517
      %v540 = vadd.f32 %v505, %v517
      %v541 = vadd.f32 %v506, %v517
      %v542 = vadd.f32 %v507, %v517
      %v543 = vadd.f32 %v508, %v517
      %v544 = vadd.f32 %v509, %v517
      %v545 = vadd.f32 %v510, %v517
      %v546 = vadd.f32 %v511, %v517
      %v547 = vadd.f32 %v512, %v517
      %v548 = vadd.f32 %v513, %v517
      %v549 = vadd.f32 %v514, %v517
      %v550 = vadd.f32 %v515, %v517
      %v551 = vmax.f32 %v519, 0.0
      %v552 = vmax.f32 %v520, 0.0
      %v553 = vmax.f32 %v521, 0.0
      %v554 = vmax.f32 %v522, 0.0
      %v555 = vmax.f32 %v523, 0.0
      %v556 = vmax.f32 %v524, 0.0
      %v557 = vmax.f32 %v525, 0.0
      %v558 = vmax.f32 %v526, 0.0
      %v559 = vmax.f32 %v527, 0.0
      %v560 = vmax.f32 %v528, 0.0
      %v561 = vmax.f32 %v529, 0.0
      %v562 = vmax.f32 %v530, 0.0
      %v563 = vmax.f32 %v531, 0.0
      %v564 = vmax.f32 %v532, 0.0
      %v565 = vmax.f32 %v533, 0.0
      %v566 = vmax.f32 %v534, 0.0
      %v567 = vmax.f32 %v535, 0.0
      %v568 = vmax.f32 %v536, 0.0
      %v569 = vmax.f32 %v537, 0.0
      %v570 = vmax.f32 %v538, 0.0
      %v571 = vmax.f32 %v539, 0.0
      %v572 = vmax.f32 %v540, 0.0
      %v573 = vmax.f32 %v541, 0.0
      %v574 = vmax.f32 %v542, 0.0
      %v575 = vmax.f32 %v543, 0.0
      %v576 = vmax.f32 %v544, 0.0
      %v577 = vmax.f32 %v545, 0.0
      %v578 = vmax.f32 %v546, 0.0
      %v579 = vmax.f32 %v547, 0.0
      %v580 = vmax.f32 %v548, 0.0
      %v581 = vmax.f32 %v549, 0.0
      %v582 = vmax.f32 %v550, 0.0
      %p583 = scmp.gt.s32.totalorder %s23, 0
      %v584 = vld [vmem:[%s414] sm:$0xff]
      %v585 = vld [vmem:[%s414 + $0x8] sm:$0xff]
      %v586 = vmul.f32 %v584, %v482
      %v587 = vmul.f32 %v585, %v482
      %v588 = vadd.f32 %v586, %v517
      %v589 = vadd.f32 %v587, %v517
      %v590 = vmax.f32 %v588, 0.0
      %v591 = vmax.f32 %v589, 0.0
      %s592 = scalar_select %p583, 1, 0
      %v593 = vstv %s592
      %vm594 = vcmp.eq.s32.totalorder %v593, 1
      %v595 = vsel %vm594, %v590, 0.0
      %v596 = vsel %vm594, %v591, 0.0
      %p597 = scmp.lt.s32.totalorder %s23, 0
      %v598 = vld [vmem:[%s431] sm:$0xff]
      %v599 = vld [vmem:[%s431 + $0x8] sm:$0xff]
      %v600 = vmul.f32 %v598, %v482
      %v601 = vmul.f32 %v599, %v482
      %v602 = vadd.f32 %v600, %v517
      %v603 = vadd.f32 %v601, %v517
      %v604 = vmax.f32 %v602, 0.0
      %v605 = vmax.f32 %v603, 0.0
      %s606 = scalar_select %p597, 1, 0
      %v607 = vstv %s606
      %vm608 = vcmp.eq.s32.totalorder %v607, 1
      %v609 = vsel %vm608, %v604, 0.0
      %v610 = vsel %vm608, %v605, 0.0
      %v611 = vlaneseq
      %v612 = vshrl.u32 %v611, 7
      %v613 = vadd.s32 %v612, 8
      %vm614 = vcmp.gt.s32.totalorder %v612, 0
      %vm615 = vcmp.gt.s32.totalorder %v613, 0
      %v616 = vrot.slane %v595, 7
      %v617 = vrot.slane %v596, 7
      %v618 = vrot.slane %v551, 7
      %v619 = vrot.slane %v552, 7
      %v620 = vrot.slane %v553, 7
      %v621 = vrot.slane %v554, 7
      %v622 = vrot.slane %v555, 7
      %v623 = vrot.slane %v556, 7
      %v624 = vrot.slane %v557, 7
      %v625 = vrot.slane %v558, 7
      %v626 = vrot.slane %v559, 7
      %v627 = vrot.slane %v560, 7
      %v628 = vrot.slane %v561, 7
      %v629 = vrot.slane %v562, 7
      %v630 = vrot.slane %v563, 7
      %v631 = vrot.slane %v564, 7
      %v632 = vrot.slane %v565, 7
      %v633 = vrot.slane %v566, 7
      %v634 = vrot.slane %v567, 7
      %v635 = vrot.slane %v568, 7
      %v636 = vrot.slane %v569, 7
      %v637 = vrot.slane %v570, 7
      %v638 = vrot.slane %v571, 7
      %v639 = vrot.slane %v572, 7
      %v640 = vrot.slane %v573, 7
      %v641 = vrot.slane %v574, 7
      %v642 = vrot.slane %v575, 7
      %v643 = vrot.slane %v576, 7
      %v644 = vrot.slane %v577, 7
      %v645 = vrot.slane %v578, 7
      %v646 = vrot.slane %v579, 7
      %v647 = vrot.slane %v580, 7
      %v648 = vrot.slane %v581, 7
      %v649 = vrot.slane %v582, 7
      %v650 = vrot.slane %v609, 7
      %v651 = vrot.slane %v610, 7
      %vm652 = vcmp.lt.s32.totalorder %v612, 1
      %v653 = vsel %vm652, %v650, %v651
      %v654 = vsel %vm652, %v649, %v650
      %v655 = vsel %vm652, %v648, %v649
      %v656 = vsel %vm652, %v647, %v648
      %v657 = vsel %vm652, %v646, %v647
      %v658 = vsel %vm652, %v645, %v646
      %v659 = vsel %vm652, %v644, %v645
      %v660 = vsel %vm652, %v643, %v644
      %v661 = vsel %vm652, %v642, %v643
      %v662 = vsel %vm652, %v641, %v642
      %v663 = vsel %vm652, %v640, %v641
      %v664 = vsel %vm652, %v639, %v640
      %v665 = vsel %vm652, %v638, %v639
      %v666 = vsel %vm652, %v637, %v638
      %v667 = vsel %vm652, %v636, %v637
      %v668 = vsel %vm652, %v635, %v636
      %v669 = vsel %vm652, %v634, %v635
      %v670 = vsel %vm652, %v633, %v634
      %v671 = vsel %vm652, %v632, %v633
      %v672 = vsel %vm652, %v631, %v632
      %v673 = vsel %vm652, %v630, %v631
      %v674 = vsel %vm652, %v629, %v630
      %v675 = vsel %vm652, %v628, %v629
      %v676 = vsel %vm652, %v627, %v628
      %v677 = vsel %vm652, %v626, %v627
      %v678 = vsel %vm652, %v625, %v626
      %v679 = vsel %vm652, %v624, %v625
      %v680 = vsel %vm652, %v623, %v624
      %v681 = vsel %vm652, %v622, %v623
      %v682 = vsel %vm652, %v621, %v622
      %v683 = vsel %vm652, %v620, %v621
      %v684 = vsel %vm652, %v619, %v620
      %v685 = vsel %vm652, %v618, %v619
      %v686 = vsel %vm652, %v617, %v618
      %v687 = vsel %vm652, %v616, %v617
      %v688 = vsel %vm652, %v651, %v616
      %v689 = vsel %vm614, %v688, 0.0
      %v690 = vsel %vm615, %v687, 0.0
      %v691 = vsel %vm614, %v686, 0.0
      %v692 = vsel %vm615, %v685, 0.0
      %v693 = vsel %vm614, %v684, 0.0
      %v694 = vsel %vm615, %v683, 0.0
      %v695 = vsel %vm614, %v682, 0.0
      %v696 = vsel %vm615, %v681, 0.0
      %v697 = vsel %vm614, %v680, 0.0
      %v698 = vsel %vm615, %v679, 0.0
      %v699 = vsel %vm614, %v678, 0.0
      %v700 = vsel %vm615, %v677, 0.0
      %v701 = vsel %vm614, %v676, 0.0
      %v702 = vsel %vm615, %v675, 0.0
      %v703 = vsel %vm614, %v674, 0.0
      %v704 = vsel %vm615, %v673, 0.0
      %v705 = vsel %vm614, %v672, 0.0
      %v706 = vsel %vm615, %v671, 0.0
      %v707 = vsel %vm614, %v670, 0.0
      %v708 = vsel %vm615, %v669, 0.0
      %v709 = vsel %vm614, %v668, 0.0
      %v710 = vsel %vm615, %v667, 0.0
      %v711 = vsel %vm614, %v666, 0.0
      %v712 = vsel %vm615, %v665, 0.0
      %v713 = vsel %vm614, %v664, 0.0
      %v714 = vsel %vm615, %v663, 0.0
      %v715 = vsel %vm614, %v662, 0.0
      %v716 = vsel %vm615, %v661, 0.0
      %v717 = vsel %vm614, %v660, 0.0
      %v718 = vsel %vm615, %v659, 0.0
      %v719 = vsel %vm614, %v658, 0.0
      %v720 = vsel %vm615, %v657, 0.0
      %v721 = vsel %vm614, %v656, 0.0
      %v722 = vsel %vm615, %v655, 0.0
      %v723 = vsel %vm614, %v654, 0.0
      %v724 = vsel %vm615, %v653, 0.0
      %vm725 = vcmp.lt.s32.totalorder %v612, 15
      %vm726 = vcmp.lt.s32.totalorder %v613, 15
      %v727 = vrot.slane %v595, 1
      %v728 = vrot.slane %v596, 1
      %v729 = vrot.slane %v551, 1
      %v730 = vrot.slane %v552, 1
      %v731 = vrot.slane %v553, 1
      %v732 = vrot.slane %v554, 1
      %v733 = vrot.slane %v555, 1
      %v734 = vrot.slane %v556, 1
      %v735 = vrot.slane %v557, 1
      %v736 = vrot.slane %v558, 1
      %v737 = vrot.slane %v559, 1
      %v738 = vrot.slane %v560, 1
      %v739 = vrot.slane %v561, 1
      %v740 = vrot.slane %v562, 1
      %v741 = vrot.slane %v563, 1
      %v742 = vrot.slane %v564, 1
      %v743 = vrot.slane %v565, 1
      %v744 = vrot.slane %v566, 1
      %v745 = vrot.slane %v567, 1
      %v746 = vrot.slane %v568, 1
      %v747 = vrot.slane %v569, 1
      %v748 = vrot.slane %v570, 1
      %v749 = vrot.slane %v571, 1
      %v750 = vrot.slane %v572, 1
      %v751 = vrot.slane %v573, 1
      %v752 = vrot.slane %v574, 1
      %v753 = vrot.slane %v575, 1
      %v754 = vrot.slane %v576, 1
      %v755 = vrot.slane %v577, 1
      %v756 = vrot.slane %v578, 1
      %v757 = vrot.slane %v579, 1
      %v758 = vrot.slane %v580, 1
      %v759 = vrot.slane %v581, 1
      %v760 = vrot.slane %v582, 1
      %v761 = vrot.slane %v609, 1
      %v762 = vrot.slane %v610, 1
      %vm763 = vcmp.lt.s32.totalorder %v612, 7
      %v764 = vsel %vm763, %v761, %v762
      %v765 = vsel %vm763, %v760, %v761
      %v766 = vsel %vm763, %v759, %v760
      %v767 = vsel %vm763, %v758, %v759
      %v768 = vsel %vm763, %v757, %v758
      %v769 = vsel %vm763, %v756, %v757
      %v770 = vsel %vm763, %v755, %v756
      %v771 = vsel %vm763, %v754, %v755
      %v772 = vsel %vm763, %v753, %v754
      %v773 = vsel %vm763, %v752, %v753
      %v774 = vsel %vm763, %v751, %v752
      %v775 = vsel %vm763, %v750, %v751
      %v776 = vsel %vm763, %v749, %v750
      %v777 = vsel %vm763, %v748, %v749
      %v778 = vsel %vm763, %v747, %v748
      %v779 = vsel %vm763, %v746, %v747
      %v780 = vsel %vm763, %v745, %v746
      %v781 = vsel %vm763, %v744, %v745
      %v782 = vsel %vm763, %v743, %v744
      %v783 = vsel %vm763, %v742, %v743
      %v784 = vsel %vm763, %v741, %v742
      %v785 = vsel %vm763, %v740, %v741
      %v786 = vsel %vm763, %v739, %v740
      %v787 = vsel %vm763, %v738, %v739
      %v788 = vsel %vm763, %v737, %v738
      %v789 = vsel %vm763, %v736, %v737
      %v790 = vsel %vm763, %v735, %v736
      %v791 = vsel %vm763, %v734, %v735
      %v792 = vsel %vm763, %v733, %v734
      %v793 = vsel %vm763, %v732, %v733
      %v794 = vsel %vm763, %v731, %v732
      %v795 = vsel %vm763, %v730, %v731
      %v796 = vsel %vm763, %v729, %v730
      %v797 = vsel %vm763, %v728, %v729
      %v798 = vsel %vm763, %v727, %v728
      %v799 = vsel %vm763, %v762, %v727
      %v800 = vsel %vm725, %v798, 0.0
      %v801 = vsel %vm726, %v797, 0.0
      %v802 = vsel %vm725, %v796, 0.0
      %v803 = vsel %vm726, %v795, 0.0
      %v804 = vsel %vm725, %v794, 0.0
      %v805 = vsel %vm726, %v793, 0.0
      %v806 = vsel %vm725, %v792, 0.0
      %v807 = vsel %vm726, %v791, 0.0
      %v808 = vsel %vm725, %v790, 0.0
      %v809 = vsel %vm726, %v789, 0.0
      %v810 = vsel %vm725, %v788, 0.0
      %v811 = vsel %vm726, %v787, 0.0
      %v812 = vsel %vm725, %v786, 0.0
      %v813 = vsel %vm726, %v785, 0.0
      %v814 = vsel %vm725, %v784, 0.0
      %v815 = vsel %vm726, %v783, 0.0
      %v816 = vsel %vm725, %v782, 0.0
      %v817 = vsel %vm726, %v781, 0.0
      %v818 = vsel %vm725, %v780, 0.0
      %v819 = vsel %vm726, %v779, 0.0
      %v820 = vsel %vm725, %v778, 0.0
      %v821 = vsel %vm726, %v777, 0.0
      %v822 = vsel %vm725, %v776, 0.0
      %v823 = vsel %vm726, %v775, 0.0
      %v824 = vsel %vm725, %v774, 0.0
      %v825 = vsel %vm726, %v773, 0.0
      %v826 = vsel %vm725, %v772, 0.0
      %v827 = vsel %vm726, %v771, 0.0
      %v828 = vsel %vm725, %v770, 0.0
      %v829 = vsel %vm726, %v769, 0.0
      %v830 = vsel %vm725, %v768, 0.0
      %v831 = vsel %vm726, %v767, 0.0
      %v832 = vsel %vm725, %v766, 0.0
      %v833 = vsel %vm726, %v765, 0.0
      %v834 = vsel %vm725, %v764, 0.0
      %v835 = vsel %vm726, %v799, 0.0
      %v836 = vld [vmem:[%s5] sm:$0xf]
      %s837 = scalar_lea.vmem %s5, 4
      %v838 = vld [vmem:[%s837] sm:$0xf]
      %vm839 = vcmask 31744
      %v841 = vsel %vm839, %v595, 0
      %v844 = vsel %vm839, %v596, 0
      %v847 = vsel %vm839, %v551, 0
      %v850 = vsel %vm839, %v552, 0
      %v853 = vsel %vm839, %v553, 0
      %v856 = vsel %vm839, %v554, 0
      %v859 = vsel %vm839, %v555, 0
      %v862 = vsel %vm839, %v556, 0
      %v865 = vsel %vm839, %v557, 0
      %v868 = vsel %vm839, %v558, 0
      %v871 = vsel %vm839, %v559, 0
      %v874 = vsel %vm839, %v560, 0
      %v877 = vsel %vm839, %v561, 0
      %v880 = vsel %vm839, %v562, 0
      %v883 = vsel %vm839, %v563, 0
      %v886 = vsel %vm839, %v564, 0
      %v889 = vsel %vm839, %v565, 0
      %v892 = vsel %vm839, %v566, 0
      %v895 = vsel %vm839, %v567, 0
      %v898 = vsel %vm839, %v568, 0
      %v901 = vsel %vm839, %v569, 0
      %v904 = vsel %vm839, %v570, 0
      %v907 = vsel %vm839, %v571, 0
      %v910 = vsel %vm839, %v572, 0
      %v913 = vsel %vm839, %v573, 0
      %v916 = vsel %vm839, %v574, 0
      %v919 = vsel %vm839, %v575, 0
      %v922 = vsel %vm839, %v576, 0
      %v925 = vsel %vm839, %v577, 0
      %v928 = vsel %vm839, %v578, 0
      %v931 = vsel %vm839, %v579, 0
      %v934 = vsel %vm839, %v580, 0
      %vm936 = vcmask 1043456
      %v938 = vsel %vm936, %v838, 0
      %940 = vmatpush.msra.mxu0 0.0
      %941 = vmatpush.msra.mxu0 0.0
      %942 = vmatpush.msra.mxu0 0.0
      %943 = vmatpush.msra.mxu0 0.0
      %944 = vmatpush.msra.mxu0 0.0
      %945 = vmatpush.msra.mxu0 0.0
      %946 = vmatpush.msra.mxu0 0.0
      %947 = vmatpush.msra.mxu0 0.0
      %948 = vmatpush.msra.mxu0 0.0
      %949 = vmatpush.msra.mxu0 0.0
      %950 = vmatpush.msra.mxu0 0.0
      %951 = vmatpush.msra.mxu0 0.0
      %952 = vmatpush.msra.mxu0 0.0
      %953 = vmatpush.msra.mxu0 0.0
      %954 = vmatpush.msra.mxu0 0.0
      %955 = vmatpush.msra.mxu0 %v938
      %956 = vmatmul.f32.gmra.mxu0 %v841
      %v957 = vpop.f32.mrf.mxu0
      %v958 = vadd.f32 0.0, %v957
      %959 = vmatmul.f32.gmra.mxu0 %v844
      %v960 = vpop.f32.mrf.mxu0
      %v961 = vadd.f32 0.0, %v960
      %962 = vmatmul.f32.gmra.mxu0 %v847
      %v963 = vpop.f32.mrf.mxu0
      %v964 = vadd.f32 0.0, %v963
      %965 = vmatmul.f32.gmra.mxu0 %v850
      %v966 = vpop.f32.mrf.mxu0
      %v967 = vadd.f32 0.0, %v966
      %968 = vmatmul.f32.gmra.mxu0 %v853
      %v969 = vpop.f32.mrf.mxu0
      %v970 = vadd.f32 0.0, %v969
      %971 = vmatmul.f32.gmra.mxu0 %v856
      %v972 = vpop.f32.mrf.mxu0
      %v973 = vadd.f32 0.0, %v972
      %974 = vmatmul.f32.gmra.mxu0 %v859
      %v975 = vpop.f32.mrf.mxu0
      %v976 = vadd.f32 0.0, %v975
      %977 = vmatmul.f32.gmra.mxu0 %v862
      %v978 = vpop.f32.mrf.mxu0
      %v979 = vadd.f32 0.0, %v978
      %980 = vmatmul.f32.gmra.mxu0 %v865
      %v981 = vpop.f32.mrf.mxu0
      %v982 = vadd.f32 0.0, %v981
      %983 = vmatmul.f32.gmra.mxu0 %v868
      %v984 = vpop.f32.mrf.mxu0
      %v985 = vadd.f32 0.0, %v984
      %986 = vmatmul.f32.gmra.mxu0 %v871
      %v987 = vpop.f32.mrf.mxu0
      %v988 = vadd.f32 0.0, %v987
      %989 = vmatmul.f32.gmra.mxu0 %v874
      %v990 = vpop.f32.mrf.mxu0
      %v991 = vadd.f32 0.0, %v990
      %992 = vmatmul.f32.gmra.mxu0 %v877
      %v993 = vpop.f32.mrf.mxu0
      %v994 = vadd.f32 0.0, %v993
      %995 = vmatmul.f32.gmra.mxu0 %v880
      %v996 = vpop.f32.mrf.mxu0
      %v997 = vadd.f32 0.0, %v996
      %998 = vmatmul.f32.gmra.mxu0 %v883
      %v999 = vpop.f32.mrf.mxu0
      %v1000 = vadd.f32 0.0, %v999
      %1001 = vmatmul.f32.gmra.mxu0 %v886
      %v1002 = vpop.f32.mrf.mxu0
      %v1003 = vadd.f32 0.0, %v1002
      %1004 = vmatmul.f32.gmra.mxu0 %v889
      %v1005 = vpop.f32.mrf.mxu0
      %v1006 = vadd.f32 0.0, %v1005
      %1007 = vmatmul.f32.gmra.mxu0 %v892
      %v1008 = vpop.f32.mrf.mxu0
      %v1009 = vadd.f32 0.0, %v1008
      %1010 = vmatmul.f32.gmra.mxu0 %v895
      %v1011 = vpop.f32.mrf.mxu0
      %v1012 = vadd.f32 0.0, %v1011
      %1013 = vmatmul.f32.gmra.mxu0 %v898
      %v1014 = vpop.f32.mrf.mxu0
      %v1015 = vadd.f32 0.0, %v1014
      %1016 = vmatmul.f32.gmra.mxu0 %v901
      %v1017 = vpop.f32.mrf.mxu0
      %v1018 = vadd.f32 0.0, %v1017
      %1019 = vmatmul.f32.gmra.mxu0 %v904
      %v1020 = vpop.f32.mrf.mxu0
      %v1021 = vadd.f32 0.0, %v1020
      %1022 = vmatmul.f32.gmra.mxu0 %v907
      %v1023 = vpop.f32.mrf.mxu0
      %v1024 = vadd.f32 0.0, %v1023
      %1025 = vmatmul.f32.gmra.mxu0 %v910
      %v1026 = vpop.f32.mrf.mxu0
      %v1027 = vadd.f32 0.0, %v1026
      %1028 = vmatmul.f32.gmra.mxu0 %v913
      %v1029 = vpop.f32.mrf.mxu0
      %v1030 = vadd.f32 0.0, %v1029
      %1031 = vmatmul.f32.gmra.mxu0 %v916
      %v1032 = vpop.f32.mrf.mxu0
      %v1033 = vadd.f32 0.0, %v1032
      %1034 = vmatmul.f32.gmra.mxu0 %v919
      %v1035 = vpop.f32.mrf.mxu0
      %v1036 = vadd.f32 0.0, %v1035
      %1037 = vmatmul.f32.gmra.mxu0 %v922
      %v1038 = vpop.f32.mrf.mxu0
      %v1039 = vadd.f32 0.0, %v1038
      %1040 = vmatmul.f32.gmra.mxu0 %v925
      %v1041 = vpop.f32.mrf.mxu0
      %v1042 = vadd.f32 0.0, %v1041
      %1043 = vmatmul.f32.gmra.mxu0 %v928
      %v1044 = vpop.f32.mrf.mxu0
      %v1045 = vadd.f32 0.0, %v1044
      %1046 = vmatmul.f32.gmra.mxu0 %v931
      %v1047 = vpop.f32.mrf.mxu0
      %v1048 = vadd.f32 0.0, %v1047
      %1049 = vmatmul.f32.gmra.mxu0 %v934
      %v1050 = vpop.f32.mrf.mxu0
      %v1051 = vadd.f32 0.0, %v1050
      %1052 = vdwg.mxu0
      %v1054 = vsel %vm839, %v689, 0
      %v1057 = vsel %vm839, %v690, 0
      %v1060 = vsel %vm839, %v691, 0
      %v1063 = vsel %vm839, %v692, 0
      %v1066 = vsel %vm839, %v693, 0
      %v1069 = vsel %vm839, %v694, 0
      %v1072 = vsel %vm839, %v695, 0
      %v1075 = vsel %vm839, %v696, 0
      %v1078 = vsel %vm839, %v697, 0
      %v1081 = vsel %vm839, %v698, 0
      %v1084 = vsel %vm839, %v699, 0
      %v1087 = vsel %vm839, %v700, 0
      %v1090 = vsel %vm839, %v701, 0
      %v1093 = vsel %vm839, %v702, 0
      %v1096 = vsel %vm839, %v703, 0
      %v1099 = vsel %vm839, %v704, 0
      %v1102 = vsel %vm839, %v705, 0
      %v1105 = vsel %vm839, %v706, 0
      %v1108 = vsel %vm839, %v707, 0
      %v1111 = vsel %vm839, %v708, 0
      %v1114 = vsel %vm839, %v709, 0
      %v1117 = vsel %vm839, %v710, 0
      %v1120 = vsel %vm839, %v711, 0
      %v1123 = vsel %vm839, %v712, 0
      %v1126 = vsel %vm839, %v713, 0
      %v1129 = vsel %vm839, %v714, 0
      %v1132 = vsel %vm839, %v715, 0
      %v1135 = vsel %vm839, %v716, 0
      %v1138 = vsel %vm839, %v717, 0
      %v1141 = vsel %vm839, %v718, 0
      %v1144 = vsel %vm839, %v719, 0
      %v1147 = vsel %vm839, %v720, 0
      %v1150 = vsel %vm936, %v836, 0
      %1152 = vmatpush.msra.mxu0 0.0
      %1153 = vmatpush.msra.mxu0 0.0
      %1154 = vmatpush.msra.mxu0 0.0
      %1155 = vmatpush.msra.mxu0 0.0
      %1156 = vmatpush.msra.mxu0 0.0
      %1157 = vmatpush.msra.mxu0 0.0
      %1158 = vmatpush.msra.mxu0 0.0
      %1159 = vmatpush.msra.mxu0 0.0
      %1160 = vmatpush.msra.mxu0 0.0
      %1161 = vmatpush.msra.mxu0 0.0
      %1162 = vmatpush.msra.mxu0 0.0
      %1163 = vmatpush.msra.mxu0 0.0
      %1164 = vmatpush.msra.mxu0 0.0
      %1165 = vmatpush.msra.mxu0 0.0
      %1166 = vmatpush.msra.mxu0 0.0
      %1167 = vmatpush.msra.mxu0 %v1150
      %1168 = vmatmul.f32.gmra.mxu0 %v1054
      %v1169 = vpop.f32.mrf.mxu0
      %v1170 = vadd.f32 %v958, %v1169
      %1171 = vmatmul.f32.gmra.mxu0 %v1057
      %v1172 = vpop.f32.mrf.mxu0
      %v1173 = vadd.f32 %v961, %v1172
      %1174 = vmatmul.f32.gmra.mxu0 %v1060
      %v1175 = vpop.f32.mrf.mxu0
      %v1176 = vadd.f32 %v964, %v1175
      %1177 = vmatmul.f32.gmra.mxu0 %v1063
      %v1178 = vpop.f32.mrf.mxu0
      %v1179 = vadd.f32 %v967, %v1178
      %1180 = vmatmul.f32.gmra.mxu0 %v1066
      %v1181 = vpop.f32.mrf.mxu0
      %v1182 = vadd.f32 %v970, %v1181
      %1183 = vmatmul.f32.gmra.mxu0 %v1069
      %v1184 = vpop.f32.mrf.mxu0
      %v1185 = vadd.f32 %v973, %v1184
      %1186 = vmatmul.f32.gmra.mxu0 %v1072
      %v1187 = vpop.f32.mrf.mxu0
      %v1188 = vadd.f32 %v976, %v1187
      %1189 = vmatmul.f32.gmra.mxu0 %v1075
      %v1190 = vpop.f32.mrf.mxu0
      %v1191 = vadd.f32 %v979, %v1190
      %1192 = vmatmul.f32.gmra.mxu0 %v1078
      %v1193 = vpop.f32.mrf.mxu0
      %v1194 = vadd.f32 %v982, %v1193
      %1195 = vmatmul.f32.gmra.mxu0 %v1081
      %v1196 = vpop.f32.mrf.mxu0
      %v1197 = vadd.f32 %v985, %v1196
      %1198 = vmatmul.f32.gmra.mxu0 %v1084
      %v1199 = vpop.f32.mrf.mxu0
      %v1200 = vadd.f32 %v988, %v1199
      %1201 = vmatmul.f32.gmra.mxu0 %v1087
      %v1202 = vpop.f32.mrf.mxu0
      %v1203 = vadd.f32 %v991, %v1202
      %1204 = vmatmul.f32.gmra.mxu0 %v1090
      %v1205 = vpop.f32.mrf.mxu0
      %v1206 = vadd.f32 %v994, %v1205
      %1207 = vmatmul.f32.gmra.mxu0 %v1093
      %v1208 = vpop.f32.mrf.mxu0
      %v1209 = vadd.f32 %v997, %v1208
      %1210 = vmatmul.f32.gmra.mxu0 %v1096
      %v1211 = vpop.f32.mrf.mxu0
      %v1212 = vadd.f32 %v1000, %v1211
      %1213 = vmatmul.f32.gmra.mxu0 %v1099
      %v1214 = vpop.f32.mrf.mxu0
      %v1215 = vadd.f32 %v1003, %v1214
      %1216 = vmatmul.f32.gmra.mxu0 %v1102
      %v1217 = vpop.f32.mrf.mxu0
      %v1218 = vadd.f32 %v1006, %v1217
      %1219 = vmatmul.f32.gmra.mxu0 %v1105
      %v1220 = vpop.f32.mrf.mxu0
      %v1221 = vadd.f32 %v1009, %v1220
      %1222 = vmatmul.f32.gmra.mxu0 %v1108
      %v1223 = vpop.f32.mrf.mxu0
      %v1224 = vadd.f32 %v1012, %v1223
      %1225 = vmatmul.f32.gmra.mxu0 %v1111
      %v1226 = vpop.f32.mrf.mxu0
      %v1227 = vadd.f32 %v1015, %v1226
      %1228 = vmatmul.f32.gmra.mxu0 %v1114
      %v1229 = vpop.f32.mrf.mxu0
      %v1230 = vadd.f32 %v1018, %v1229
      %1231 = vmatmul.f32.gmra.mxu0 %v1117
      %v1232 = vpop.f32.mrf.mxu0
      %v1233 = vadd.f32 %v1021, %v1232
      %1234 = vmatmul.f32.gmra.mxu0 %v1120
      %v1235 = vpop.f32.mrf.mxu0
      %v1236 = vadd.f32 %v1024, %v1235
      %1237 = vmatmul.f32.gmra.mxu0 %v1123
      %v1238 = vpop.f32.mrf.mxu0
      %v1239 = vadd.f32 %v1027, %v1238
      %1240 = vmatmul.f32.gmra.mxu0 %v1126
      %v1241 = vpop.f32.mrf.mxu0
      %v1242 = vadd.f32 %v1030, %v1241
      %1243 = vmatmul.f32.gmra.mxu0 %v1129
      %v1244 = vpop.f32.mrf.mxu0
      %v1245 = vadd.f32 %v1033, %v1244
      %1246 = vmatmul.f32.gmra.mxu0 %v1132
      %v1247 = vpop.f32.mrf.mxu0
      %v1248 = vadd.f32 %v1036, %v1247
      %1249 = vmatmul.f32.gmra.mxu0 %v1135
      %v1250 = vpop.f32.mrf.mxu0
      %v1251 = vadd.f32 %v1039, %v1250
      %1252 = vmatmul.f32.gmra.mxu0 %v1138
      %v1253 = vpop.f32.mrf.mxu0
      %v1254 = vadd.f32 %v1042, %v1253
      %1255 = vmatmul.f32.gmra.mxu0 %v1141
      %v1256 = vpop.f32.mrf.mxu0
      %v1257 = vadd.f32 %v1045, %v1256
      %1258 = vmatmul.f32.gmra.mxu0 %v1144
      %v1259 = vpop.f32.mrf.mxu0
      %v1260 = vadd.f32 %v1048, %v1259
      %1261 = vmatmul.f32.gmra.mxu0 %v1147
      %v1262 = vpop.f32.mrf.mxu0
      %v1263 = vadd.f32 %v1051, %v1262
      %1264 = vdwg.mxu0
      %s1265 = scalar_lea.vmem %s5, 8
      %v1266 = vld [vmem:[%s1265] sm:$0xf]
      %v1268 = vsel %vm839, %v800, 0
      %v1271 = vsel %vm839, %v801, 0
      %v1274 = vsel %vm839, %v802, 0
      %v1277 = vsel %vm839, %v803, 0
      %v1280 = vsel %vm839, %v804, 0
      %v1283 = vsel %vm839, %v805, 0
      %v1286 = vsel %vm839, %v806, 0
      %v1289 = vsel %vm839, %v807, 0
      %v1292 = vsel %vm839, %v808, 0
      %v1295 = vsel %vm839, %v809, 0
      %v1298 = vsel %vm839, %v810, 0
      %v1301 = vsel %vm839, %v811, 0
      %v1304 = vsel %vm839, %v812, 0
      %v1307 = vsel %vm839, %v813, 0
      %v1310 = vsel %vm839, %v814, 0
      %v1313 = vsel %vm839, %v815, 0
      %v1316 = vsel %vm839, %v816, 0
      %v1319 = vsel %vm839, %v817, 0
      %v1322 = vsel %vm839, %v818, 0
      %v1325 = vsel %vm839, %v819, 0
      %v1328 = vsel %vm839, %v820, 0
      %v1331 = vsel %vm839, %v821, 0
      %v1334 = vsel %vm839, %v822, 0
      %v1337 = vsel %vm839, %v823, 0
      %v1340 = vsel %vm839, %v824, 0
      %v1343 = vsel %vm839, %v825, 0
      %v1346 = vsel %vm839, %v826, 0
      %v1349 = vsel %vm839, %v827, 0
      %v1352 = vsel %vm839, %v828, 0
      %v1355 = vsel %vm839, %v829, 0
      %v1358 = vsel %vm839, %v830, 0
      %v1361 = vsel %vm839, %v831, 0
      %v1364 = vsel %vm936, %v1266, 0
      %1366 = vmatpush.msra.mxu0 0.0
      %1367 = vmatpush.msra.mxu0 0.0
      %1368 = vmatpush.msra.mxu0 0.0
      %1369 = vmatpush.msra.mxu0 0.0
      %1370 = vmatpush.msra.mxu0 0.0
      %1371 = vmatpush.msra.mxu0 0.0
      %1372 = vmatpush.msra.mxu0 0.0
      %1373 = vmatpush.msra.mxu0 0.0
      %1374 = vmatpush.msra.mxu0 0.0
      %1375 = vmatpush.msra.mxu0 0.0
      %1376 = vmatpush.msra.mxu0 0.0
      %1377 = vmatpush.msra.mxu0 0.0
      %1378 = vmatpush.msra.mxu0 0.0
      %1379 = vmatpush.msra.mxu0 0.0
      %1380 = vmatpush.msra.mxu0 0.0
      %1381 = vmatpush.msra.mxu0 %v1364
      %1382 = vmatmul.f32.gmra.mxu0 %v1268
      %v1383 = vpop.f32.mrf.mxu0
      %v1384 = vadd.f32 0.0, %v1383
      %1385 = vmatmul.f32.gmra.mxu0 %v1271
      %v1386 = vpop.f32.mrf.mxu0
      %v1387 = vadd.f32 0.0, %v1386
      %1388 = vmatmul.f32.gmra.mxu0 %v1274
      %v1389 = vpop.f32.mrf.mxu0
      %v1390 = vadd.f32 0.0, %v1389
      %1391 = vmatmul.f32.gmra.mxu0 %v1277
      %v1392 = vpop.f32.mrf.mxu0
      %v1393 = vadd.f32 0.0, %v1392
      %1394 = vmatmul.f32.gmra.mxu0 %v1280
      %v1395 = vpop.f32.mrf.mxu0
      %v1396 = vadd.f32 0.0, %v1395
      %1397 = vmatmul.f32.gmra.mxu0 %v1283
      %v1398 = vpop.f32.mrf.mxu0
      %v1399 = vadd.f32 0.0, %v1398
      %1400 = vmatmul.f32.gmra.mxu0 %v1286
      %v1401 = vpop.f32.mrf.mxu0
      %v1402 = vadd.f32 0.0, %v1401
      %1403 = vmatmul.f32.gmra.mxu0 %v1289
      %v1404 = vpop.f32.mrf.mxu0
      %v1405 = vadd.f32 0.0, %v1404
      %1406 = vmatmul.f32.gmra.mxu0 %v1292
      %v1407 = vpop.f32.mrf.mxu0
      %v1408 = vadd.f32 0.0, %v1407
      %1409 = vmatmul.f32.gmra.mxu0 %v1295
      %v1410 = vpop.f32.mrf.mxu0
      %v1411 = vadd.f32 0.0, %v1410
      %1412 = vmatmul.f32.gmra.mxu0 %v1298
      %v1413 = vpop.f32.mrf.mxu0
      %v1414 = vadd.f32 0.0, %v1413
      %1415 = vmatmul.f32.gmra.mxu0 %v1301
      %v1416 = vpop.f32.mrf.mxu0
      %v1417 = vadd.f32 0.0, %v1416
      %1418 = vmatmul.f32.gmra.mxu0 %v1304
      %v1419 = vpop.f32.mrf.mxu0
      %v1420 = vadd.f32 0.0, %v1419
      %1421 = vmatmul.f32.gmra.mxu0 %v1307
      %v1422 = vpop.f32.mrf.mxu0
      %v1423 = vadd.f32 0.0, %v1422
      %1424 = vmatmul.f32.gmra.mxu0 %v1310
      %v1425 = vpop.f32.mrf.mxu0
      %v1426 = vadd.f32 0.0, %v1425
      %1427 = vmatmul.f32.gmra.mxu0 %v1313
      %v1428 = vpop.f32.mrf.mxu0
      %v1429 = vadd.f32 0.0, %v1428
      %1430 = vmatmul.f32.gmra.mxu0 %v1316
      %v1431 = vpop.f32.mrf.mxu0
      %v1432 = vadd.f32 0.0, %v1431
      %1433 = vmatmul.f32.gmra.mxu0 %v1319
      %v1434 = vpop.f32.mrf.mxu0
      %v1435 = vadd.f32 0.0, %v1434
      %1436 = vmatmul.f32.gmra.mxu0 %v1322
      %v1437 = vpop.f32.mrf.mxu0
      %v1438 = vadd.f32 0.0, %v1437
      %1439 = vmatmul.f32.gmra.mxu0 %v1325
      %v1440 = vpop.f32.mrf.mxu0
      %v1441 = vadd.f32 0.0, %v1440
      %1442 = vmatmul.f32.gmra.mxu0 %v1328
      %v1443 = vpop.f32.mrf.mxu0
      %v1444 = vadd.f32 0.0, %v1443
      %1445 = vmatmul.f32.gmra.mxu0 %v1331
      %v1446 = vpop.f32.mrf.mxu0
      %v1447 = vadd.f32 0.0, %v1446
      %1448 = vmatmul.f32.gmra.mxu0 %v1334
      %v1449 = vpop.f32.mrf.mxu0
      %v1450 = vadd.f32 0.0, %v1449
      %1451 = vmatmul.f32.gmra.mxu0 %v1337
      %v1452 = vpop.f32.mrf.mxu0
      %v1453 = vadd.f32 0.0, %v1452
      %1454 = vmatmul.f32.gmra.mxu0 %v1340
      %v1455 = vpop.f32.mrf.mxu0
      %v1456 = vadd.f32 0.0, %v1455
      %1457 = vmatmul.f32.gmra.mxu0 %v1343
      %v1458 = vpop.f32.mrf.mxu0
      %v1459 = vadd.f32 0.0, %v1458
      %1460 = vmatmul.f32.gmra.mxu0 %v1346
      %v1461 = vpop.f32.mrf.mxu0
      %v1462 = vadd.f32 0.0, %v1461
      %1463 = vmatmul.f32.gmra.mxu0 %v1349
      %v1464 = vpop.f32.mrf.mxu0
      %v1465 = vadd.f32 0.0, %v1464
      %1466 = vmatmul.f32.gmra.mxu0 %v1352
      %v1467 = vpop.f32.mrf.mxu0
      %v1468 = vadd.f32 0.0, %v1467
      %1469 = vmatmul.f32.gmra.mxu0 %v1355
      %v1470 = vpop.f32.mrf.mxu0
      %v1471 = vadd.f32 0.0, %v1470
      %1472 = vmatmul.f32.gmra.mxu0 %v1358
      %v1473 = vpop.f32.mrf.mxu0
      %v1474 = vadd.f32 0.0, %v1473
      %1475 = vmatmul.f32.gmra.mxu0 %v1361
      %v1476 = vpop.f32.mrf.mxu0
      %v1477 = vadd.f32 0.0, %v1476
      %1478 = vdwg.mxu0
      %v1479 = vadd.f32 %v1170, %v1384
      %v1480 = vadd.f32 %v1173, %v1387
      %v1481 = vadd.f32 %v1176, %v1390
      %v1482 = vadd.f32 %v1179, %v1393
      %v1483 = vadd.f32 %v1182, %v1396
      %v1484 = vadd.f32 %v1185, %v1399
      %v1485 = vadd.f32 %v1188, %v1402
      %v1486 = vadd.f32 %v1191, %v1405
      %v1487 = vadd.f32 %v1194, %v1408
      %v1488 = vadd.f32 %v1197, %v1411
      %v1489 = vadd.f32 %v1200, %v1414
      %v1490 = vadd.f32 %v1203, %v1417
      %v1491 = vadd.f32 %v1206, %v1420
      %v1492 = vadd.f32 %v1209, %v1423
      %v1493 = vadd.f32 %v1212, %v1426
      %v1494 = vadd.f32 %v1215, %v1429
      %v1495 = vadd.f32 %v1218, %v1432
      %v1496 = vadd.f32 %v1221, %v1435
      %v1497 = vadd.f32 %v1224, %v1438
      %v1498 = vadd.f32 %v1227, %v1441
      %v1499 = vadd.f32 %v1230, %v1444
      %v1500 = vadd.f32 %v1233, %v1447
      %v1501 = vadd.f32 %v1236, %v1450
      %v1502 = vadd.f32 %v1239, %v1453
      %v1503 = vadd.f32 %v1242, %v1456
      %v1504 = vadd.f32 %v1245, %v1459
      %v1505 = vadd.f32 %v1248, %v1462
      %v1506 = vadd.f32 %v1251, %v1465
      %v1507 = vadd.f32 %v1254, %v1468
      %v1508 = vadd.f32 %v1257, %v1471
      %v1509 = vadd.f32 %v1260, %v1474
      %v1510 = vadd.f32 %v1263, %v1477
      %s1511 = scalar_lea.vmem %s5, 12
      %v1512 = vld [vmem:[%s1511] sm:$0xf]
      %v1514 = vsel %vm839, %v721, 0
      %v1517 = vsel %vm839, %v722, 0
      %v1520 = vsel %vm936, %v1512, 0
      %1522 = vmatpush.msra.mxu0 0.0
      %1523 = vmatpush.msra.mxu0 0.0
      %1524 = vmatpush.msra.mxu0 0.0
      %1525 = vmatpush.msra.mxu0 0.0
      %1526 = vmatpush.msra.mxu0 0.0
      %1527 = vmatpush.msra.mxu0 0.0
      %1528 = vmatpush.msra.mxu0 0.0
      %1529 = vmatpush.msra.mxu0 0.0
      %1530 = vmatpush.msra.mxu0 0.0
      %1531 = vmatpush.msra.mxu0 0.0
      %1532 = vmatpush.msra.mxu0 0.0
      %1533 = vmatpush.msra.mxu0 0.0
      %1534 = vmatpush.msra.mxu0 0.0
      %1535 = vmatpush.msra.mxu0 0.0
      %1536 = vmatpush.msra.mxu0 0.0
      %1537 = vmatpush.msra.mxu0 %v1520
      %1538 = vmatmul.f32.gmra.mxu0 %v1060
      %v1539 = vpop.f32.mrf.mxu0
      %v1540 = vadd.f32 0.0, %v1539
      %1541 = vmatmul.f32.gmra.mxu0 %v1063
      %v1542 = vpop.f32.mrf.mxu0
      %v1543 = vadd.f32 0.0, %v1542
      %1544 = vmatmul.f32.gmra.mxu0 %v1066
      %v1545 = vpop.f32.mrf.mxu0
      %v1546 = vadd.f32 0.0, %v1545
      %1547 = vmatmul.f32.gmra.mxu0 %v1069
      %v1548 = vpop.f32.mrf.mxu0
      %v1549 = vadd.f32 0.0, %v1548
      %1550 = vmatmul.f32.gmra.mxu0 %v1072
      %v1551 = vpop.f32.mrf.mxu0
      %v1552 = vadd.f32 0.0, %v1551
      %1553 = vmatmul.f32.gmra.mxu0 %v1075
      %v1554 = vpop.f32.mrf.mxu0
      %v1555 = vadd.f32 0.0, %v1554
      %1556 = vmatmul.f32.gmra.mxu0 %v1078
      %v1557 = vpop.f32.mrf.mxu0
      %v1558 = vadd.f32 0.0, %v1557
      %1559 = vmatmul.f32.gmra.mxu0 %v1081
      %v1560 = vpop.f32.mrf.mxu0
      %v1561 = vadd.f32 0.0, %v1560
      %1562 = vmatmul.f32.gmra.mxu0 %v1084
      %v1563 = vpop.f32.mrf.mxu0
      %v1564 = vadd.f32 0.0, %v1563
      %1565 = vmatmul.f32.gmra.mxu0 %v1087
      %v1566 = vpop.f32.mrf.mxu0
      %v1567 = vadd.f32 0.0, %v1566
      %1568 = vmatmul.f32.gmra.mxu0 %v1090
      %v1569 = vpop.f32.mrf.mxu0
      %v1570 = vadd.f32 0.0, %v1569
      %1571 = vmatmul.f32.gmra.mxu0 %v1093
      %v1572 = vpop.f32.mrf.mxu0
      %v1573 = vadd.f32 0.0, %v1572
      %1574 = vmatmul.f32.gmra.mxu0 %v1096
      %v1575 = vpop.f32.mrf.mxu0
      %v1576 = vadd.f32 0.0, %v1575
      %1577 = vmatmul.f32.gmra.mxu0 %v1099
      %v1578 = vpop.f32.mrf.mxu0
      %v1579 = vadd.f32 0.0, %v1578
      %1580 = vmatmul.f32.gmra.mxu0 %v1102
      %v1581 = vpop.f32.mrf.mxu0
      %v1582 = vadd.f32 0.0, %v1581
      %1583 = vmatmul.f32.gmra.mxu0 %v1105
      %v1584 = vpop.f32.mrf.mxu0
      %v1585 = vadd.f32 0.0, %v1584
      %1586 = vmatmul.f32.gmra.mxu0 %v1108
      %v1587 = vpop.f32.mrf.mxu0
      %v1588 = vadd.f32 0.0, %v1587
      %1589 = vmatmul.f32.gmra.mxu0 %v1111
      %v1590 = vpop.f32.mrf.mxu0
      %v1591 = vadd.f32 0.0, %v1590
      %1592 = vmatmul.f32.gmra.mxu0 %v1114
      %v1593 = vpop.f32.mrf.mxu0
      %v1594 = vadd.f32 0.0, %v1593
      %1595 = vmatmul.f32.gmra.mxu0 %v1117
      %v1596 = vpop.f32.mrf.mxu0
      %v1597 = vadd.f32 0.0, %v1596
      %1598 = vmatmul.f32.gmra.mxu0 %v1120
      %v1599 = vpop.f32.mrf.mxu0
      %v1600 = vadd.f32 0.0, %v1599
      %1601 = vmatmul.f32.gmra.mxu0 %v1123
      %v1602 = vpop.f32.mrf.mxu0
      %v1603 = vadd.f32 0.0, %v1602
      %1604 = vmatmul.f32.gmra.mxu0 %v1126
      %v1605 = vpop.f32.mrf.mxu0
      %v1606 = vadd.f32 0.0, %v1605
      %1607 = vmatmul.f32.gmra.mxu0 %v1129
      %v1608 = vpop.f32.mrf.mxu0
      %v1609 = vadd.f32 0.0, %v1608
      %1610 = vmatmul.f32.gmra.mxu0 %v1132
      %v1611 = vpop.f32.mrf.mxu0
      %v1612 = vadd.f32 0.0, %v1611
      %1613 = vmatmul.f32.gmra.mxu0 %v1135
      %v1614 = vpop.f32.mrf.mxu0
      %v1615 = vadd.f32 0.0, %v1614
      %1616 = vmatmul.f32.gmra.mxu0 %v1138
      %v1617 = vpop.f32.mrf.mxu0
      %v1618 = vadd.f32 0.0, %v1617
      %1619 = vmatmul.f32.gmra.mxu0 %v1141
      %v1620 = vpop.f32.mrf.mxu0
      %v1621 = vadd.f32 0.0, %v1620
      %1622 = vmatmul.f32.gmra.mxu0 %v1144
      %v1623 = vpop.f32.mrf.mxu0
      %v1624 = vadd.f32 0.0, %v1623
      %1625 = vmatmul.f32.gmra.mxu0 %v1147
      %v1626 = vpop.f32.mrf.mxu0
      %v1627 = vadd.f32 0.0, %v1626
      %1628 = vmatmul.f32.gmra.mxu0 %v1514
      %v1629 = vpop.f32.mrf.mxu0
      %v1630 = vadd.f32 0.0, %v1629
      %1631 = vmatmul.f32.gmra.mxu0 %v1517
      %v1632 = vpop.f32.mrf.mxu0
      %v1633 = vadd.f32 0.0, %v1632
      %1634 = vdwg.mxu0
      %v1635 = vadd.f32 %v1479, %v1540
      %v1636 = vadd.f32 %v1480, %v1543
      %v1637 = vadd.f32 %v1481, %v1546
      %v1638 = vadd.f32 %v1482, %v1549
      %v1639 = vadd.f32 %v1483, %v1552
      %v1640 = vadd.f32 %v1484, %v1555
      %v1641 = vadd.f32 %v1485, %v1558
      %v1642 = vadd.f32 %v1486, %v1561
      %v1643 = vadd.f32 %v1487, %v1564
      %v1644 = vadd.f32 %v1488, %v1567
      %v1645 = vadd.f32 %v1489, %v1570
      %v1646 = vadd.f32 %v1490, %v1573
      %v1647 = vadd.f32 %v1491, %v1576
      %v1648 = vadd.f32 %v1492, %v1579
      %v1649 = vadd.f32 %v1493, %v1582
      %v1650 = vadd.f32 %v1494, %v1585
      %v1651 = vadd.f32 %v1495, %v1588
      %v1652 = vadd.f32 %v1496, %v1591
      %v1653 = vadd.f32 %v1497, %v1594
      %v1654 = vadd.f32 %v1498, %v1597
      %v1655 = vadd.f32 %v1499, %v1600
      %v1656 = vadd.f32 %v1500, %v1603
      %v1657 = vadd.f32 %v1501, %v1606
      %v1658 = vadd.f32 %v1502, %v1609
      %v1659 = vadd.f32 %v1503, %v1612
      %v1660 = vadd.f32 %v1504, %v1615
      %v1661 = vadd.f32 %v1505, %v1618
      %v1662 = vadd.f32 %v1506, %v1621
      %v1663 = vadd.f32 %v1507, %v1624
      %v1664 = vadd.f32 %v1508, %v1627
      %v1665 = vadd.f32 %v1509, %v1630
      %v1666 = vadd.f32 %v1510, %v1633
      %s1667 = scalar_lea.vmem %s5, 16
      %v1668 = vld [vmem:[%s1667] sm:$0xf]
      %v1670 = vsel %vm839, %v581, 0
      %v1673 = vsel %vm839, %v582, 0
      %v1676 = vsel %vm936, %v1668, 0
      %1678 = vmatpush.msra.mxu0 0.0
      %1679 = vmatpush.msra.mxu0 0.0
      %1680 = vmatpush.msra.mxu0 0.0
      %1681 = vmatpush.msra.mxu0 0.0
      %1682 = vmatpush.msra.mxu0 0.0
      %1683 = vmatpush.msra.mxu0 0.0
      %1684 = vmatpush.msra.mxu0 0.0
      %1685 = vmatpush.msra.mxu0 0.0
      %1686 = vmatpush.msra.mxu0 0.0
      %1687 = vmatpush.msra.mxu0 0.0
      %1688 = vmatpush.msra.mxu0 0.0
      %1689 = vmatpush.msra.mxu0 0.0
      %1690 = vmatpush.msra.mxu0 0.0
      %1691 = vmatpush.msra.mxu0 0.0
      %1692 = vmatpush.msra.mxu0 0.0
      %1693 = vmatpush.msra.mxu0 %v1676
      %1694 = vmatmul.f32.gmra.mxu0 %v847
      %v1695 = vpop.f32.mrf.mxu0
      %v1696 = vadd.f32 0.0, %v1695
      %1697 = vmatmul.f32.gmra.mxu0 %v850
      %v1698 = vpop.f32.mrf.mxu0
      %v1699 = vadd.f32 0.0, %v1698
      %1700 = vmatmul.f32.gmra.mxu0 %v853
      %v1701 = vpop.f32.mrf.mxu0
      %v1702 = vadd.f32 0.0, %v1701
      %1703 = vmatmul.f32.gmra.mxu0 %v856
      %v1704 = vpop.f32.mrf.mxu0
      %v1705 = vadd.f32 0.0, %v1704
      %1706 = vmatmul.f32.gmra.mxu0 %v859
      %v1707 = vpop.f32.mrf.mxu0
      %v1708 = vadd.f32 0.0, %v1707
      %1709 = vmatmul.f32.gmra.mxu0 %v862
      %v1710 = vpop.f32.mrf.mxu0
      %v1711 = vadd.f32 0.0, %v1710
      %1712 = vmatmul.f32.gmra.mxu0 %v865
      %v1713 = vpop.f32.mrf.mxu0
      %v1714 = vadd.f32 0.0, %v1713
      %1715 = vmatmul.f32.gmra.mxu0 %v868
      %v1716 = vpop.f32.mrf.mxu0
      %v1717 = vadd.f32 0.0, %v1716
      %1718 = vmatmul.f32.gmra.mxu0 %v871
      %v1719 = vpop.f32.mrf.mxu0
      %v1720 = vadd.f32 0.0, %v1719
      %1721 = vmatmul.f32.gmra.mxu0 %v874
      %v1722 = vpop.f32.mrf.mxu0
      %v1723 = vadd.f32 0.0, %v1722
      %1724 = vmatmul.f32.gmra.mxu0 %v877
      %v1725 = vpop.f32.mrf.mxu0
      %v1726 = vadd.f32 0.0, %v1725
      %1727 = vmatmul.f32.gmra.mxu0 %v880
      %v1728 = vpop.f32.mrf.mxu0
      %v1729 = vadd.f32 0.0, %v1728
      %1730 = vmatmul.f32.gmra.mxu0 %v883
      %v1731 = vpop.f32.mrf.mxu0
      %v1732 = vadd.f32 0.0, %v1731
      %1733 = vmatmul.f32.gmra.mxu0 %v886
      %v1734 = vpop.f32.mrf.mxu0
      %v1735 = vadd.f32 0.0, %v1734
      %1736 = vmatmul.f32.gmra.mxu0 %v889
      %v1737 = vpop.f32.mrf.mxu0
      %v1738 = vadd.f32 0.0, %v1737
      %1739 = vmatmul.f32.gmra.mxu0 %v892
      %v1740 = vpop.f32.mrf.mxu0
      %v1741 = vadd.f32 0.0, %v1740
      %1742 = vmatmul.f32.gmra.mxu0 %v895
      %v1743 = vpop.f32.mrf.mxu0
      %v1744 = vadd.f32 0.0, %v1743
      %1745 = vmatmul.f32.gmra.mxu0 %v898
      %v1746 = vpop.f32.mrf.mxu0
      %v1747 = vadd.f32 0.0, %v1746
      %1748 = vmatmul.f32.gmra.mxu0 %v901
      %v1749 = vpop.f32.mrf.mxu0
      %v1750 = vadd.f32 0.0, %v1749
      %1751 = vmatmul.f32.gmra.mxu0 %v904
      %v1752 = vpop.f32.mrf.mxu0
      %v1753 = vadd.f32 0.0, %v1752
      %1754 = vmatmul.f32.gmra.mxu0 %v907
      %v1755 = vpop.f32.mrf.mxu0
      %v1756 = vadd.f32 0.0, %v1755
      %1757 = vmatmul.f32.gmra.mxu0 %v910
      %v1758 = vpop.f32.mrf.mxu0
      %v1759 = vadd.f32 0.0, %v1758
      %1760 = vmatmul.f32.gmra.mxu0 %v913
      %v1761 = vpop.f32.mrf.mxu0
      %v1762 = vadd.f32 0.0, %v1761
      %1763 = vmatmul.f32.gmra.mxu0 %v916
      %v1764 = vpop.f32.mrf.mxu0
      %v1765 = vadd.f32 0.0, %v1764
      %1766 = vmatmul.f32.gmra.mxu0 %v919
      %v1767 = vpop.f32.mrf.mxu0
      %v1768 = vadd.f32 0.0, %v1767
      %1769 = vmatmul.f32.gmra.mxu0 %v922
      %v1770 = vpop.f32.mrf.mxu0
      %v1771 = vadd.f32 0.0, %v1770
      %1772 = vmatmul.f32.gmra.mxu0 %v925
      %v1773 = vpop.f32.mrf.mxu0
      %v1774 = vadd.f32 0.0, %v1773
      %1775 = vmatmul.f32.gmra.mxu0 %v928
      %v1776 = vpop.f32.mrf.mxu0
      %v1777 = vadd.f32 0.0, %v1776
      %1778 = vmatmul.f32.gmra.mxu0 %v931
      %v1779 = vpop.f32.mrf.mxu0
      %v1780 = vadd.f32 0.0, %v1779
      %1781 = vmatmul.f32.gmra.mxu0 %v934
      %v1782 = vpop.f32.mrf.mxu0
      %v1783 = vadd.f32 0.0, %v1782
      %1784 = vmatmul.f32.gmra.mxu0 %v1670
      %v1785 = vpop.f32.mrf.mxu0
      %v1786 = vadd.f32 0.0, %v1785
      %1787 = vmatmul.f32.gmra.mxu0 %v1673
      %v1788 = vpop.f32.mrf.mxu0
      %v1789 = vadd.f32 0.0, %v1788
      %1790 = vdwg.mxu0
      %v1791 = vadd.f32 %v1635, %v1696
      %v1792 = vadd.f32 %v1636, %v1699
      %v1793 = vadd.f32 %v1637, %v1702
      %v1794 = vadd.f32 %v1638, %v1705
      %v1795 = vadd.f32 %v1639, %v1708
      %v1796 = vadd.f32 %v1640, %v1711
      %v1797 = vadd.f32 %v1641, %v1714
      %v1798 = vadd.f32 %v1642, %v1717
      %v1799 = vadd.f32 %v1643, %v1720
      %v1800 = vadd.f32 %v1644, %v1723
      %v1801 = vadd.f32 %v1645, %v1726
      %v1802 = vadd.f32 %v1646, %v1729
      %v1803 = vadd.f32 %v1647, %v1732
      %v1804 = vadd.f32 %v1648, %v1735
      %v1805 = vadd.f32 %v1649, %v1738
      %v1806 = vadd.f32 %v1650, %v1741
      %v1807 = vadd.f32 %v1651, %v1744
      %v1808 = vadd.f32 %v1652, %v1747
      %v1809 = vadd.f32 %v1653, %v1750
      %v1810 = vadd.f32 %v1654, %v1753
      %v1811 = vadd.f32 %v1655, %v1756
      %v1812 = vadd.f32 %v1656, %v1759
      %v1813 = vadd.f32 %v1657, %v1762
      %v1814 = vadd.f32 %v1658, %v1765
      %v1815 = vadd.f32 %v1659, %v1768
      %v1816 = vadd.f32 %v1660, %v1771
      %v1817 = vadd.f32 %v1661, %v1774
      %v1818 = vadd.f32 %v1662, %v1777
      %v1819 = vadd.f32 %v1663, %v1780
      %v1820 = vadd.f32 %v1664, %v1783
      %v1821 = vadd.f32 %v1665, %v1786
      %v1822 = vadd.f32 %v1666, %v1789
      %s1823 = scalar_lea.vmem %s5, 20
      %v1824 = vld [vmem:[%s1823] sm:$0xf]
      %v1826 = vsel %vm839, %v832, 0
      %v1829 = vsel %vm839, %v833, 0
      %v1832 = vsel %vm936, %v1824, 0
      %1834 = vmatpush.msra.mxu0 0.0
      %1835 = vmatpush.msra.mxu0 0.0
      %1836 = vmatpush.msra.mxu0 0.0
      %1837 = vmatpush.msra.mxu0 0.0
      %1838 = vmatpush.msra.mxu0 0.0
      %1839 = vmatpush.msra.mxu0 0.0
      %1840 = vmatpush.msra.mxu0 0.0
      %1841 = vmatpush.msra.mxu0 0.0
      %1842 = vmatpush.msra.mxu0 0.0
      %1843 = vmatpush.msra.mxu0 0.0
      %1844 = vmatpush.msra.mxu0 0.0
      %1845 = vmatpush.msra.mxu0 0.0
      %1846 = vmatpush.msra.mxu0 0.0
      %1847 = vmatpush.msra.mxu0 0.0
      %1848 = vmatpush.msra.mxu0 0.0
      %1849 = vmatpush.msra.mxu0 %v1832
      %1850 = vmatmul.f32.gmra.mxu0 %v1274
      %v1851 = vpop.f32.mrf.mxu0
      %v1852 = vadd.f32 0.0, %v1851
      %1853 = vmatmul.f32.gmra.mxu0 %v1277
      %v1854 = vpop.f32.mrf.mxu0
      %v1855 = vadd.f32 0.0, %v1854
      %1856 = vmatmul.f32.gmra.mxu0 %v1280
      %v1857 = vpop.f32.mrf.mxu0
      %v1858 = vadd.f32 0.0, %v1857
      %1859 = vmatmul.f32.gmra.mxu0 %v1283
      %v1860 = vpop.f32.mrf.mxu0
      %v1861 = vadd.f32 0.0, %v1860
      %1862 = vmatmul.f32.gmra.mxu0 %v1286
      %v1863 = vpop.f32.mrf.mxu0
      %v1864 = vadd.f32 0.0, %v1863
      %1865 = vmatmul.f32.gmra.mxu0 %v1289
      %v1866 = vpop.f32.mrf.mxu0
      %v1867 = vadd.f32 0.0, %v1866
      %1868 = vmatmul.f32.gmra.mxu0 %v1292
      %v1869 = vpop.f32.mrf.mxu0
      %v1870 = vadd.f32 0.0, %v1869
      %1871 = vmatmul.f32.gmra.mxu0 %v1295
      %v1872 = vpop.f32.mrf.mxu0
      %v1873 = vadd.f32 0.0, %v1872
      %1874 = vmatmul.f32.gmra.mxu0 %v1298
      %v1875 = vpop.f32.mrf.mxu0
      %v1876 = vadd.f32 0.0, %v1875
      %1877 = vmatmul.f32.gmra.mxu0 %v1301
      %v1878 = vpop.f32.mrf.mxu0
      %v1879 = vadd.f32 0.0, %v1878
      %1880 = vmatmul.f32.gmra.mxu0 %v1304
      %v1881 = vpop.f32.mrf.mxu0
      %v1882 = vadd.f32 0.0, %v1881
      %1883 = vmatmul.f32.gmra.mxu0 %v1307
      %v1884 = vpop.f32.mrf.mxu0
      %v1885 = vadd.f32 0.0, %v1884
      %1886 = vmatmul.f32.gmra.mxu0 %v1310
      %v1887 = vpop.f32.mrf.mxu0
      %v1888 = vadd.f32 0.0, %v1887
      %1889 = vmatmul.f32.gmra.mxu0 %v1313
      %v1890 = vpop.f32.mrf.mxu0
      %v1891 = vadd.f32 0.0, %v1890
      %1892 = vmatmul.f32.gmra.mxu0 %v1316
      %v1893 = vpop.f32.mrf.mxu0
      %v1894 = vadd.f32 0.0, %v1893
      %1895 = vmatmul.f32.gmra.mxu0 %v1319
      %v1896 = vpop.f32.mrf.mxu0
      %v1897 = vadd.f32 0.0, %v1896
      %1898 = vmatmul.f32.gmra.mxu0 %v1322
      %v1899 = vpop.f32.mrf.mxu0
      %v1900 = vadd.f32 0.0, %v1899
      %1901 = vmatmul.f32.gmra.mxu0 %v1325
      %v1902 = vpop.f32.mrf.mxu0
      %v1903 = vadd.f32 0.0, %v1902
      %1904 = vmatmul.f32.gmra.mxu0 %v1328
      %v1905 = vpop.f32.mrf.mxu0
      %v1906 = vadd.f32 0.0, %v1905
      %1907 = vmatmul.f32.gmra.mxu0 %v1331
      %v1908 = vpop.f32.mrf.mxu0
      %v1909 = vadd.f32 0.0, %v1908
      %1910 = vmatmul.f32.gmra.mxu0 %v1334
      %v1911 = vpop.f32.mrf.mxu0
      %v1912 = vadd.f32 0.0, %v1911
      %1913 = vmatmul.f32.gmra.mxu0 %v1337
      %v1914 = vpop.f32.mrf.mxu0
      %v1915 = vadd.f32 0.0, %v1914
      %1916 = vmatmul.f32.gmra.mxu0 %v1340
      %v1917 = vpop.f32.mrf.mxu0
      %v1918 = vadd.f32 0.0, %v1917
      %1919 = vmatmul.f32.gmra.mxu0 %v1343
      %v1920 = vpop.f32.mrf.mxu0
      %v1921 = vadd.f32 0.0, %v1920
      %1922 = vmatmul.f32.gmra.mxu0 %v1346
      %v1923 = vpop.f32.mrf.mxu0
      %v1924 = vadd.f32 0.0, %v1923
      %1925 = vmatmul.f32.gmra.mxu0 %v1349
      %v1926 = vpop.f32.mrf.mxu0
      %v1927 = vadd.f32 0.0, %v1926
      %1928 = vmatmul.f32.gmra.mxu0 %v1352
      %v1929 = vpop.f32.mrf.mxu0
      %v1930 = vadd.f32 0.0, %v1929
      %1931 = vmatmul.f32.gmra.mxu0 %v1355
      %v1932 = vpop.f32.mrf.mxu0
      %v1933 = vadd.f32 0.0, %v1932
      %1934 = vmatmul.f32.gmra.mxu0 %v1358
      %v1935 = vpop.f32.mrf.mxu0
      %v1936 = vadd.f32 0.0, %v1935
      %1937 = vmatmul.f32.gmra.mxu0 %v1361
      %v1938 = vpop.f32.mrf.mxu0
      %v1939 = vadd.f32 0.0, %v1938
      %1940 = vmatmul.f32.gmra.mxu0 %v1826
      %v1941 = vpop.f32.mrf.mxu0
      %v1942 = vadd.f32 0.0, %v1941
      %1943 = vmatmul.f32.gmra.mxu0 %v1829
      %v1944 = vpop.f32.mrf.mxu0
      %v1945 = vadd.f32 0.0, %v1944
      %1946 = vdwg.mxu0
      %v1947 = vadd.f32 %v1791, %v1852
      %v1948 = vadd.f32 %v1792, %v1855
      %v1949 = vadd.f32 %v1793, %v1858
      %v1950 = vadd.f32 %v1794, %v1861
      %v1951 = vadd.f32 %v1795, %v1864
      %v1952 = vadd.f32 %v1796, %v1867
      %v1953 = vadd.f32 %v1797, %v1870
      %v1954 = vadd.f32 %v1798, %v1873
      %v1955 = vadd.f32 %v1799, %v1876
      %v1956 = vadd.f32 %v1800, %v1879
      %v1957 = vadd.f32 %v1801, %v1882
      %v1958 = vadd.f32 %v1802, %v1885
      %v1959 = vadd.f32 %v1803, %v1888
      %v1960 = vadd.f32 %v1804, %v1891
      %v1961 = vadd.f32 %v1805, %v1894
      %v1962 = vadd.f32 %v1806, %v1897
      %v1963 = vadd.f32 %v1807, %v1900
      %v1964 = vadd.f32 %v1808, %v1903
      %v1965 = vadd.f32 %v1809, %v1906
      %v1966 = vadd.f32 %v1810, %v1909
      %v1967 = vadd.f32 %v1811, %v1912
      %v1968 = vadd.f32 %v1812, %v1915
      %v1969 = vadd.f32 %v1813, %v1918
      %v1970 = vadd.f32 %v1814, %v1921
      %v1971 = vadd.f32 %v1815, %v1924
      %v1972 = vadd.f32 %v1816, %v1927
      %v1973 = vadd.f32 %v1817, %v1930
      %v1974 = vadd.f32 %v1818, %v1933
      %v1975 = vadd.f32 %v1819, %v1936
      %v1976 = vadd.f32 %v1820, %v1939
      %v1977 = vadd.f32 %v1821, %v1942
      %v1978 = vadd.f32 %v1822, %v1945
      %s1979 = scalar_lea.vmem %s5, 24
      %v1980 = vld [vmem:[%s1979] sm:$0xf]
      %v1982 = vsel %vm839, %v723, 0
      %v1985 = vsel %vm839, %v724, 0
      %v1988 = vsel %vm936, %v1980, 0
      %1990 = vmatpush.msra.mxu0 0.0
      %1991 = vmatpush.msra.mxu0 0.0
      %1992 = vmatpush.msra.mxu0 0.0
      %1993 = vmatpush.msra.mxu0 0.0
      %1994 = vmatpush.msra.mxu0 0.0
      %1995 = vmatpush.msra.mxu0 0.0
      %1996 = vmatpush.msra.mxu0 0.0
      %1997 = vmatpush.msra.mxu0 0.0
      %1998 = vmatpush.msra.mxu0 0.0
      %1999 = vmatpush.msra.mxu0 0.0
      %2000 = vmatpush.msra.mxu0 0.0
      %2001 = vmatpush.msra.mxu0 0.0
      %2002 = vmatpush.msra.mxu0 0.0
      %2003 = vmatpush.msra.mxu0 0.0
      %2004 = vmatpush.msra.mxu0 0.0
      %2005 = vmatpush.msra.mxu0 %v1988
      %2006 = vmatmul.f32.gmra.mxu0 %v1066
      %v2007 = vpop.f32.mrf.mxu0
      %v2008 = vadd.f32 0.0, %v2007
      %2009 = vmatmul.f32.gmra.mxu0 %v1069
      %v2010 = vpop.f32.mrf.mxu0
      %v2011 = vadd.f32 0.0, %v2010
      %2012 = vmatmul.f32.gmra.mxu0 %v1072
      %v2013 = vpop.f32.mrf.mxu0
      %v2014 = vadd.f32 0.0, %v2013
      %2015 = vmatmul.f32.gmra.mxu0 %v1075
      %v2016 = vpop.f32.mrf.mxu0
      %v2017 = vadd.f32 0.0, %v2016
      %2018 = vmatmul.f32.gmra.mxu0 %v1078
      %v2019 = vpop.f32.mrf.mxu0
      %v2020 = vadd.f32 0.0, %v2019
      %2021 = vmatmul.f32.gmra.mxu0 %v1081
      %v2022 = vpop.f32.mrf.mxu0
      %v2023 = vadd.f32 0.0, %v2022
      %2024 = vmatmul.f32.gmra.mxu0 %v1084
      %v2025 = vpop.f32.mrf.mxu0
      %v2026 = vadd.f32 0.0, %v2025
      %2027 = vmatmul.f32.gmra.mxu0 %v1087
      %v2028 = vpop.f32.mrf.mxu0
      %v2029 = vadd.f32 0.0, %v2028
      %2030 = vmatmul.f32.gmra.mxu0 %v1090
      %v2031 = vpop.f32.mrf.mxu0
      %v2032 = vadd.f32 0.0, %v2031
      %2033 = vmatmul.f32.gmra.mxu0 %v1093
      %v2034 = vpop.f32.mrf.mxu0
      %v2035 = vadd.f32 0.0, %v2034
      %2036 = vmatmul.f32.gmra.mxu0 %v1096
      %v2037 = vpop.f32.mrf.mxu0
      %v2038 = vadd.f32 0.0, %v2037
      %2039 = vmatmul.f32.gmra.mxu0 %v1099
      %v2040 = vpop.f32.mrf.mxu0
      %v2041 = vadd.f32 0.0, %v2040
      %2042 = vmatmul.f32.gmra.mxu0 %v1102
      %v2043 = vpop.f32.mrf.mxu0
      %v2044 = vadd.f32 0.0, %v2043
      %2045 = vmatmul.f32.gmra.mxu0 %v1105
      %v2046 = vpop.f32.mrf.mxu0
      %v2047 = vadd.f32 0.0, %v2046
      %2048 = vmatmul.f32.gmra.mxu0 %v1108
      %v2049 = vpop.f32.mrf.mxu0
      %v2050 = vadd.f32 0.0, %v2049
      %2051 = vmatmul.f32.gmra.mxu0 %v1111
      %v2052 = vpop.f32.mrf.mxu0
      %v2053 = vadd.f32 0.0, %v2052
      %2054 = vmatmul.f32.gmra.mxu0 %v1114
      %v2055 = vpop.f32.mrf.mxu0
      %v2056 = vadd.f32 0.0, %v2055
      %2057 = vmatmul.f32.gmra.mxu0 %v1117
      %v2058 = vpop.f32.mrf.mxu0
      %v2059 = vadd.f32 0.0, %v2058
      %2060 = vmatmul.f32.gmra.mxu0 %v1120
      %v2061 = vpop.f32.mrf.mxu0
      %v2062 = vadd.f32 0.0, %v2061
      %2063 = vmatmul.f32.gmra.mxu0 %v1123
      %v2064 = vpop.f32.mrf.mxu0
      %v2065 = vadd.f32 0.0, %v2064
      %2066 = vmatmul.f32.gmra.mxu0 %v1126
      %v2067 = vpop.f32.mrf.mxu0
      %v2068 = vadd.f32 0.0, %v2067
      %2069 = vmatmul.f32.gmra.mxu0 %v1129
      %v2070 = vpop.f32.mrf.mxu0
      %v2071 = vadd.f32 0.0, %v2070
      %2072 = vmatmul.f32.gmra.mxu0 %v1132
      %v2073 = vpop.f32.mrf.mxu0
      %v2074 = vadd.f32 0.0, %v2073
      %2075 = vmatmul.f32.gmra.mxu0 %v1135
      %v2076 = vpop.f32.mrf.mxu0
      %v2077 = vadd.f32 0.0, %v2076
      %2078 = vmatmul.f32.gmra.mxu0 %v1138
      %v2079 = vpop.f32.mrf.mxu0
      %v2080 = vadd.f32 0.0, %v2079
      %2081 = vmatmul.f32.gmra.mxu0 %v1141
      %v2082 = vpop.f32.mrf.mxu0
      %v2083 = vadd.f32 0.0, %v2082
      %2084 = vmatmul.f32.gmra.mxu0 %v1144
      %v2085 = vpop.f32.mrf.mxu0
      %v2086 = vadd.f32 0.0, %v2085
      %2087 = vmatmul.f32.gmra.mxu0 %v1147
      %v2088 = vpop.f32.mrf.mxu0
      %v2089 = vadd.f32 0.0, %v2088
      %2090 = vmatmul.f32.gmra.mxu0 %v1514
      %v2091 = vpop.f32.mrf.mxu0
      %v2092 = vadd.f32 0.0, %v2091
      %2093 = vmatmul.f32.gmra.mxu0 %v1517
      %v2094 = vpop.f32.mrf.mxu0
      %v2095 = vadd.f32 0.0, %v2094
      %2096 = vmatmul.f32.gmra.mxu0 %v1982
      %v2097 = vpop.f32.mrf.mxu0
      %v2098 = vadd.f32 0.0, %v2097
      %2099 = vmatmul.f32.gmra.mxu0 %v1985
      %v2100 = vpop.f32.mrf.mxu0
      %v2101 = vadd.f32 0.0, %v2100
      %2102 = vdwg.mxu0
      %v2103 = vadd.f32 %v1947, %v2008
      %v2104 = vadd.f32 %v1948, %v2011
      %v2105 = vadd.f32 %v1949, %v2014
      %v2106 = vadd.f32 %v1950, %v2017
      %v2107 = vadd.f32 %v1951, %v2020
      %v2108 = vadd.f32 %v1952, %v2023
      %v2109 = vadd.f32 %v1953, %v2026
      %v2110 = vadd.f32 %v1954, %v2029
      %v2111 = vadd.f32 %v1955, %v2032
      %v2112 = vadd.f32 %v1956, %v2035
      %v2113 = vadd.f32 %v1957, %v2038
      %v2114 = vadd.f32 %v1958, %v2041
      %v2115 = vadd.f32 %v1959, %v2044
      %v2116 = vadd.f32 %v1960, %v2047
      %v2117 = vadd.f32 %v1961, %v2050
      %v2118 = vadd.f32 %v1962, %v2053
      %v2119 = vadd.f32 %v1963, %v2056
      %v2120 = vadd.f32 %v1964, %v2059
      %v2121 = vadd.f32 %v1965, %v2062
      %v2122 = vadd.f32 %v1966, %v2065
      %v2123 = vadd.f32 %v1967, %v2068
      %v2124 = vadd.f32 %v1968, %v2071
      %v2125 = vadd.f32 %v1969, %v2074
      %v2126 = vadd.f32 %v1970, %v2077
      %v2127 = vadd.f32 %v1971, %v2080
      %v2128 = vadd.f32 %v1972, %v2083
      %v2129 = vadd.f32 %v1973, %v2086
      %v2130 = vadd.f32 %v1974, %v2089
      %v2131 = vadd.f32 %v1975, %v2092
      %v2132 = vadd.f32 %v1976, %v2095
      %v2133 = vadd.f32 %v1977, %v2098
      %v2134 = vadd.f32 %v1978, %v2101
      %s2135 = scalar_lea.vmem %s5, 28
      %v2136 = vld [vmem:[%s2135] sm:$0xf]
      %v2138 = vsel %vm839, %v609, 0
      %v2141 = vsel %vm839, %v610, 0
      %v2144 = vsel %vm936, %v2136, 0
      %2146 = vmatpush.msra.mxu0 0.0
      %2147 = vmatpush.msra.mxu0 0.0
      %2148 = vmatpush.msra.mxu0 0.0
      %2149 = vmatpush.msra.mxu0 0.0
      %2150 = vmatpush.msra.mxu0 0.0
      %2151 = vmatpush.msra.mxu0 0.0
      %2152 = vmatpush.msra.mxu0 0.0
      %2153 = vmatpush.msra.mxu0 0.0
      %2154 = vmatpush.msra.mxu0 0.0
      %2155 = vmatpush.msra.mxu0 0.0
      %2156 = vmatpush.msra.mxu0 0.0
      %2157 = vmatpush.msra.mxu0 0.0
      %2158 = vmatpush.msra.mxu0 0.0
      %2159 = vmatpush.msra.mxu0 0.0
      %2160 = vmatpush.msra.mxu0 0.0
      %2161 = vmatpush.msra.mxu0 %v2144
      %2162 = vmatmul.f32.gmra.mxu0 %v853
      %v2163 = vpop.f32.mrf.mxu0
      %v2164 = vadd.f32 0.0, %v2163
      %2165 = vmatmul.f32.gmra.mxu0 %v856
      %v2166 = vpop.f32.mrf.mxu0
      %v2167 = vadd.f32 0.0, %v2166
      %2168 = vmatmul.f32.gmra.mxu0 %v859
      %v2169 = vpop.f32.mrf.mxu0
      %v2170 = vadd.f32 0.0, %v2169
      %2171 = vmatmul.f32.gmra.mxu0 %v862
      %v2172 = vpop.f32.mrf.mxu0
      %v2173 = vadd.f32 0.0, %v2172
      %2174 = vmatmul.f32.gmra.mxu0 %v865
      %v2175 = vpop.f32.mrf.mxu0
      %v2176 = vadd.f32 0.0, %v2175
      %2177 = vmatmul.f32.gmra.mxu0 %v868
      %v2178 = vpop.f32.mrf.mxu0
      %v2179 = vadd.f32 0.0, %v2178
      %2180 = vmatmul.f32.gmra.mxu0 %v871
      %v2181 = vpop.f32.mrf.mxu0
      %v2182 = vadd.f32 0.0, %v2181
      %2183 = vmatmul.f32.gmra.mxu0 %v874
      %v2184 = vpop.f32.mrf.mxu0
      %v2185 = vadd.f32 0.0, %v2184
      %2186 = vmatmul.f32.gmra.mxu0 %v877
      %v2187 = vpop.f32.mrf.mxu0
      %v2188 = vadd.f32 0.0, %v2187
      %2189 = vmatmul.f32.gmra.mxu0 %v880
      %v2190 = vpop.f32.mrf.mxu0
      %v2191 = vadd.f32 0.0, %v2190
      %2192 = vmatmul.f32.gmra.mxu0 %v883
      %v2193 = vpop.f32.mrf.mxu0
      %v2194 = vadd.f32 0.0, %v2193
      %2195 = vmatmul.f32.gmra.mxu0 %v886
      %v2196 = vpop.f32.mrf.mxu0
      %v2197 = vadd.f32 0.0, %v2196
      %2198 = vmatmul.f32.gmra.mxu0 %v889
      %v2199 = vpop.f32.mrf.mxu0
      %v2200 = vadd.f32 0.0, %v2199
      %2201 = vmatmul.f32.gmra.mxu0 %v892
      %v2202 = vpop.f32.mrf.mxu0
      %v2203 = vadd.f32 0.0, %v2202
      %2204 = vmatmul.f32.gmra.mxu0 %v895
      %v2205 = vpop.f32.mrf.mxu0
      %v2206 = vadd.f32 0.0, %v2205
      %2207 = vmatmul.f32.gmra.mxu0 %v898
      %v2208 = vpop.f32.mrf.mxu0
      %v2209 = vadd.f32 0.0, %v2208
      %2210 = vmatmul.f32.gmra.mxu0 %v901
      %v2211 = vpop.f32.mrf.mxu0
      %v2212 = vadd.f32 0.0, %v2211
      %2213 = vmatmul.f32.gmra.mxu0 %v904
      %v2214 = vpop.f32.mrf.mxu0
      %v2215 = vadd.f32 0.0, %v2214
      %2216 = vmatmul.f32.gmra.mxu0 %v907
      %v2217 = vpop.f32.mrf.mxu0
      %v2218 = vadd.f32 0.0, %v2217
      %2219 = vmatmul.f32.gmra.mxu0 %v910
      %v2220 = vpop.f32.mrf.mxu0
      %v2221 = vadd.f32 0.0, %v2220
      %2222 = vmatmul.f32.gmra.mxu0 %v913
      %v2223 = vpop.f32.mrf.mxu0
      %v2224 = vadd.f32 0.0, %v2223
      %2225 = vmatmul.f32.gmra.mxu0 %v916
      %v2226 = vpop.f32.mrf.mxu0
      %v2227 = vadd.f32 0.0, %v2226
      %2228 = vmatmul.f32.gmra.mxu0 %v919
      %v2229 = vpop.f32.mrf.mxu0
      %v2230 = vadd.f32 0.0, %v2229
      %2231 = vmatmul.f32.gmra.mxu0 %v922
      %v2232 = vpop.f32.mrf.mxu0
      %v2233 = vadd.f32 0.0, %v2232
      %2234 = vmatmul.f32.gmra.mxu0 %v925
      %v2235 = vpop.f32.mrf.mxu0
      %v2236 = vadd.f32 0.0, %v2235
      %2237 = vmatmul.f32.gmra.mxu0 %v928
      %v2238 = vpop.f32.mrf.mxu0
      %v2239 = vadd.f32 0.0, %v2238
      %2240 = vmatmul.f32.gmra.mxu0 %v931
      %v2241 = vpop.f32.mrf.mxu0
      %v2242 = vadd.f32 0.0, %v2241
      %2243 = vmatmul.f32.gmra.mxu0 %v934
      %v2244 = vpop.f32.mrf.mxu0
      %v2245 = vadd.f32 0.0, %v2244
      %2246 = vmatmul.f32.gmra.mxu0 %v1670
      %v2247 = vpop.f32.mrf.mxu0
      %v2248 = vadd.f32 0.0, %v2247
      %2249 = vmatmul.f32.gmra.mxu0 %v1673
      %v2250 = vpop.f32.mrf.mxu0
      %v2251 = vadd.f32 0.0, %v2250
      %2252 = vmatmul.f32.gmra.mxu0 %v2138
      %v2253 = vpop.f32.mrf.mxu0
      %v2254 = vadd.f32 0.0, %v2253
      %2255 = vmatmul.f32.gmra.mxu0 %v2141
      %v2256 = vpop.f32.mrf.mxu0
      %v2257 = vadd.f32 0.0, %v2256
      %2258 = vdwg.mxu0
      %v2259 = vadd.f32 %v2103, %v2164
      %v2260 = vadd.f32 %v2104, %v2167
      %v2261 = vadd.f32 %v2105, %v2170
      %v2262 = vadd.f32 %v2106, %v2173
      %v2263 = vadd.f32 %v2107, %v2176
      %v2264 = vadd.f32 %v2108, %v2179
      %v2265 = vadd.f32 %v2109, %v2182
      %v2266 = vadd.f32 %v2110, %v2185
      %v2267 = vadd.f32 %v2111, %v2188
      %v2268 = vadd.f32 %v2112, %v2191
      %v2269 = vadd.f32 %v2113, %v2194
      %v2270 = vadd.f32 %v2114, %v2197
      %v2271 = vadd.f32 %v2115, %v2200
      %v2272 = vadd.f32 %v2116, %v2203
      %v2273 = vadd.f32 %v2117, %v2206
      %v2274 = vadd.f32 %v2118, %v2209
      %v2275 = vadd.f32 %v2119, %v2212
      %v2276 = vadd.f32 %v2120, %v2215
      %v2277 = vadd.f32 %v2121, %v2218
      %v2278 = vadd.f32 %v2122, %v2221
      %v2279 = vadd.f32 %v2123, %v2224
      %v2280 = vadd.f32 %v2124, %v2227
      %v2281 = vadd.f32 %v2125, %v2230
      %v2282 = vadd.f32 %v2126, %v2233
      %v2283 = vadd.f32 %v2127, %v2236
      %v2284 = vadd.f32 %v2128, %v2239
      %v2285 = vadd.f32 %v2129, %v2242
      %v2286 = vadd.f32 %v2130, %v2245
      %v2287 = vadd.f32 %v2131, %v2248
      %v2288 = vadd.f32 %v2132, %v2251
      %v2289 = vadd.f32 %v2133, %v2254
      %v2290 = vadd.f32 %v2134, %v2257
      %s2291 = scalar_lea.vmem %s5, 32
      %v2292 = vld [vmem:[%s2291] sm:$0xf]
      %v2294 = vsel %vm839, %v834, 0
      %v2297 = vsel %vm839, %v835, 0
      %v2300 = vsel %vm936, %v2292, 0
      %2302 = vmatpush.msra.mxu0 0.0
      %2303 = vmatpush.msra.mxu0 0.0
      %2304 = vmatpush.msra.mxu0 0.0
      %2305 = vmatpush.msra.mxu0 0.0
      %2306 = vmatpush.msra.mxu0 0.0
      %2307 = vmatpush.msra.mxu0 0.0
      %2308 = vmatpush.msra.mxu0 0.0
      %2309 = vmatpush.msra.mxu0 0.0
      %2310 = vmatpush.msra.mxu0 0.0
      %2311 = vmatpush.msra.mxu0 0.0
      %2312 = vmatpush.msra.mxu0 0.0
      %2313 = vmatpush.msra.mxu0 0.0
      %2314 = vmatpush.msra.mxu0 0.0
      %2315 = vmatpush.msra.mxu0 0.0
      %2316 = vmatpush.msra.mxu0 0.0
      %2317 = vmatpush.msra.mxu0 %v2300
      %2318 = vmatmul.f32.gmra.mxu0 %v1280
      %v2319 = vpop.f32.mrf.mxu0
      %v2320 = vadd.f32 0.0, %v2319
      %2321 = vmatmul.f32.gmra.mxu0 %v1283
      %v2322 = vpop.f32.mrf.mxu0
      %v2323 = vadd.f32 0.0, %v2322
      %2324 = vmatmul.f32.gmra.mxu0 %v1286
      %v2325 = vpop.f32.mrf.mxu0
      %v2326 = vadd.f32 0.0, %v2325
      %2327 = vmatmul.f32.gmra.mxu0 %v1289
      %v2328 = vpop.f32.mrf.mxu0
      %v2329 = vadd.f32 0.0, %v2328
      %2330 = vmatmul.f32.gmra.mxu0 %v1292
      %v2331 = vpop.f32.mrf.mxu0
      %v2332 = vadd.f32 0.0, %v2331
      %2333 = vmatmul.f32.gmra.mxu0 %v1295
      %v2334 = vpop.f32.mrf.mxu0
      %v2335 = vadd.f32 0.0, %v2334
      %2336 = vmatmul.f32.gmra.mxu0 %v1298
      %v2337 = vpop.f32.mrf.mxu0
      %v2338 = vadd.f32 0.0, %v2337
      %2339 = vmatmul.f32.gmra.mxu0 %v1301
      %v2340 = vpop.f32.mrf.mxu0
      %v2341 = vadd.f32 0.0, %v2340
      %2342 = vmatmul.f32.gmra.mxu0 %v1304
      %v2343 = vpop.f32.mrf.mxu0
      %v2344 = vadd.f32 0.0, %v2343
      %2345 = vmatmul.f32.gmra.mxu0 %v1307
      %v2346 = vpop.f32.mrf.mxu0
      %v2347 = vadd.f32 0.0, %v2346
      %2348 = vmatmul.f32.gmra.mxu0 %v1310
      %v2349 = vpop.f32.mrf.mxu0
      %v2350 = vadd.f32 0.0, %v2349
      %2351 = vmatmul.f32.gmra.mxu0 %v1313
      %v2352 = vpop.f32.mrf.mxu0
      %v2353 = vadd.f32 0.0, %v2352
      %2354 = vmatmul.f32.gmra.mxu0 %v1316
      %v2355 = vpop.f32.mrf.mxu0
      %v2356 = vadd.f32 0.0, %v2355
      %2357 = vmatmul.f32.gmra.mxu0 %v1319
      %v2358 = vpop.f32.mrf.mxu0
      %v2359 = vadd.f32 0.0, %v2358
      %2360 = vmatmul.f32.gmra.mxu0 %v1322
      %v2361 = vpop.f32.mrf.mxu0
      %v2362 = vadd.f32 0.0, %v2361
      %2363 = vmatmul.f32.gmra.mxu0 %v1325
      %v2364 = vpop.f32.mrf.mxu0
      %v2365 = vadd.f32 0.0, %v2364
      %2366 = vmatmul.f32.gmra.mxu0 %v1328
      %v2367 = vpop.f32.mrf.mxu0
      %v2368 = vadd.f32 0.0, %v2367
      %2369 = vmatmul.f32.gmra.mxu0 %v1331
      %v2370 = vpop.f32.mrf.mxu0
      %v2371 = vadd.f32 0.0, %v2370
      %2372 = vmatmul.f32.gmra.mxu0 %v1334
      %v2373 = vpop.f32.mrf.mxu0
      %v2374 = vadd.f32 0.0, %v2373
      %2375 = vmatmul.f32.gmra.mxu0 %v1337
      %v2376 = vpop.f32.mrf.mxu0
      %v2377 = vadd.f32 0.0, %v2376
      %2378 = vmatmul.f32.gmra.mxu0 %v1340
      %v2379 = vpop.f32.mrf.mxu0
      %v2380 = vadd.f32 0.0, %v2379
      %2381 = vmatmul.f32.gmra.mxu0 %v1343
      %v2382 = vpop.f32.mrf.mxu0
      %v2383 = vadd.f32 0.0, %v2382
      %2384 = vmatmul.f32.gmra.mxu0 %v1346
      %v2385 = vpop.f32.mrf.mxu0
      %v2386 = vadd.f32 0.0, %v2385
      %2387 = vmatmul.f32.gmra.mxu0 %v1349
      %v2388 = vpop.f32.mrf.mxu0
      %v2389 = vadd.f32 0.0, %v2388
      %2390 = vmatmul.f32.gmra.mxu0 %v1352
      %v2391 = vpop.f32.mrf.mxu0
      %v2392 = vadd.f32 0.0, %v2391
      %2393 = vmatmul.f32.gmra.mxu0 %v1355
      %v2394 = vpop.f32.mrf.mxu0
      %v2395 = vadd.f32 0.0, %v2394
      %2396 = vmatmul.f32.gmra.mxu0 %v1358
      %v2397 = vpop.f32.mrf.mxu0
      %v2398 = vadd.f32 0.0, %v2397
      %2399 = vmatmul.f32.gmra.mxu0 %v1361
      %v2400 = vpop.f32.mrf.mxu0
      %v2401 = vadd.f32 0.0, %v2400
      %2402 = vmatmul.f32.gmra.mxu0 %v1826
      %v2403 = vpop.f32.mrf.mxu0
      %v2404 = vadd.f32 0.0, %v2403
      %2405 = vmatmul.f32.gmra.mxu0 %v1829
      %v2406 = vpop.f32.mrf.mxu0
      %v2407 = vadd.f32 0.0, %v2406
      %2408 = vmatmul.f32.gmra.mxu0 %v2294
      %v2409 = vpop.f32.mrf.mxu0
      %v2410 = vadd.f32 0.0, %v2409
      %2411 = vmatmul.f32.gmra.mxu0 %v2297
      %v2412 = vpop.f32.mrf.mxu0
      %v2413 = vadd.f32 0.0, %v2412
      %2414 = vdwg.mxu0
      %v2415 = vadd.f32 %v2259, %v2320
      %v2416 = vadd.f32 %v2260, %v2323
      %v2417 = vadd.f32 %v2261, %v2326
      %v2418 = vadd.f32 %v2262, %v2329
      %v2419 = vadd.f32 %v2263, %v2332
      %v2420 = vadd.f32 %v2264, %v2335
      %v2421 = vadd.f32 %v2265, %v2338
      %v2422 = vadd.f32 %v2266, %v2341
      %v2423 = vadd.f32 %v2267, %v2344
      %v2424 = vadd.f32 %v2268, %v2347
      %v2425 = vadd.f32 %v2269, %v2350
      %v2426 = vadd.f32 %v2270, %v2353
      %v2427 = vadd.f32 %v2271, %v2356
      %v2428 = vadd.f32 %v2272, %v2359
      %v2429 = vadd.f32 %v2273, %v2362
      %v2430 = vadd.f32 %v2274, %v2365
      %v2431 = vadd.f32 %v2275, %v2368
      %v2432 = vadd.f32 %v2276, %v2371
      %v2433 = vadd.f32 %v2277, %v2374
      %v2434 = vadd.f32 %v2278, %v2377
      %v2435 = vadd.f32 %v2279, %v2380
      %v2436 = vadd.f32 %v2280, %v2383
      %v2437 = vadd.f32 %v2281, %v2386
      %v2438 = vadd.f32 %v2282, %v2389
      %v2439 = vadd.f32 %v2283, %v2392
      %v2440 = vadd.f32 %v2284, %v2395
      %v2441 = vadd.f32 %v2285, %v2398
      %v2442 = vadd.f32 %v2286, %v2401
      %v2443 = vadd.f32 %v2287, %v2404
      %v2444 = vadd.f32 %v2288, %v2407
      %v2445 = vadd.f32 %v2289, %v2410
      %v2446 = vadd.f32 %v2290, %v2413
      %v2447 = vld [vmem:[%s6] sm:$0x1]
      %v2449 = vperm.slane %v2447, 0
      %v2451 = vadd.f32 %v2415, %v2449
      %v2452 = vadd.f32 %v2416, %v2449
      %v2453 = vadd.f32 %v2417, %v2449
      %v2454 = vadd.f32 %v2418, %v2449
      %v2455 = vadd.f32 %v2419, %v2449
      %v2456 = vadd.f32 %v2420, %v2449
      %v2457 = vadd.f32 %v2421, %v2449
      %v2458 = vadd.f32 %v2422, %v2449
      %v2459 = vadd.f32 %v2423, %v2449
      %v2460 = vadd.f32 %v2424, %v2449
      %v2461 = vadd.f32 %v2425, %v2449
      %v2462 = vadd.f32 %v2426, %v2449
      %v2463 = vadd.f32 %v2427, %v2449
      %v2464 = vadd.f32 %v2428, %v2449
      %v2465 = vadd.f32 %v2429, %v2449
      %v2466 = vadd.f32 %v2430, %v2449
      %v2467 = vadd.f32 %v2431, %v2449
      %v2468 = vadd.f32 %v2432, %v2449
      %v2469 = vadd.f32 %v2433, %v2449
      %v2470 = vadd.f32 %v2434, %v2449
      %v2471 = vadd.f32 %v2435, %v2449
      %v2472 = vadd.f32 %v2436, %v2449
      %v2473 = vadd.f32 %v2437, %v2449
      %v2474 = vadd.f32 %v2438, %v2449
      %v2475 = vadd.f32 %v2439, %v2449
      %v2476 = vadd.f32 %v2440, %v2449
      %v2477 = vadd.f32 %v2441, %v2449
      %v2478 = vadd.f32 %v2442, %v2449
      %v2479 = vadd.f32 %v2443, %v2449
      %v2480 = vadd.f32 %v2444, %v2449
      %v2481 = vadd.f32 %v2445, %v2449
      %v2482 = vadd.f32 %v2446, %v2449
      %vm2483 = vcmask 130048
      %2484 = vst.msk [vmem:[%s445] sm:$0xff] %vm2483, %v2451
      %2485 = vst.msk [vmem:[%s445 + $0x8] sm:$0xff] %vm2483, %v2452
      %2486 = vst.msk [vmem:[%s445 + $0x10] sm:$0xff] %vm2483, %v2453
      %2487 = vst.msk [vmem:[%s445 + $0x18] sm:$0xff] %vm2483, %v2454
      %2488 = vst.msk [vmem:[%s445 + $0x20] sm:$0xff] %vm2483, %v2455
      %2489 = vst.msk [vmem:[%s445 + $0x28] sm:$0xff] %vm2483, %v2456
      %2490 = vst.msk [vmem:[%s445 + $0x30] sm:$0xff] %vm2483, %v2457
      %2491 = vst.msk [vmem:[%s445 + $0x38] sm:$0xff] %vm2483, %v2458
      %2492 = vst.msk [vmem:[%s445 + $0x40] sm:$0xff] %vm2483, %v2459
      %2493 = vst.msk [vmem:[%s445 + $0x48] sm:$0xff] %vm2483, %v2460
      %2494 = vst.msk [vmem:[%s445 + $0x50] sm:$0xff] %vm2483, %v2461
      %2495 = vst.msk [vmem:[%s445 + $0x58] sm:$0xff] %vm2483, %v2462
      %2496 = vst.msk [vmem:[%s445 + $0x60] sm:$0xff] %vm2483, %v2463
      %2497 = vst.msk [vmem:[%s445 + $0x68] sm:$0xff] %vm2483, %v2464
      %2498 = vst.msk [vmem:[%s445 + $0x70] sm:$0xff] %vm2483, %v2465
      %2499 = vst.msk [vmem:[%s445 + $0x78] sm:$0xff] %vm2483, %v2466
      %2500 = vst.msk [vmem:[%s445 + $0x80] sm:$0xff] %vm2483, %v2467
      %2501 = vst.msk [vmem:[%s445 + $0x88] sm:$0xff] %vm2483, %v2468
      %2502 = vst.msk [vmem:[%s445 + $0x90] sm:$0xff] %vm2483, %v2469
      %2503 = vst.msk [vmem:[%s445 + $0x98] sm:$0xff] %vm2483, %v2470
      %2504 = vst.msk [vmem:[%s445 + $0xa0] sm:$0xff] %vm2483, %v2471
      %2505 = vst.msk [vmem:[%s445 + $0xa8] sm:$0xff] %vm2483, %v2472
      %2506 = vst.msk [vmem:[%s445 + $0xb0] sm:$0xff] %vm2483, %v2473
      %2507 = vst.msk [vmem:[%s445 + $0xb8] sm:$0xff] %vm2483, %v2474
      %2508 = vst.msk [vmem:[%s445 + $0xc0] sm:$0xff] %vm2483, %v2475
      %2509 = vst.msk [vmem:[%s445 + $0xc8] sm:$0xff] %vm2483, %v2476
      %2510 = vst.msk [vmem:[%s445 + $0xd0] sm:$0xff] %vm2483, %v2477
      %2511 = vst.msk [vmem:[%s445 + $0xd8] sm:$0xff] %vm2483, %v2478
      %2512 = vst.msk [vmem:[%s445 + $0xe0] sm:$0xff] %vm2483, %v2479
      %2513 = vst.msk [vmem:[%s445 + $0xe8] sm:$0xff] %vm2483, %v2480
      %2514 = vst.msk [vmem:[%s445 + $0xf0] sm:$0xff] %vm2483, %v2481
      %2515 = vst.msk [vmem:[%s445 + $0xf8] sm:$0xff] %vm2483, %v2482
      %s2516 = smul.u32 16, %s23
      %p2517 = scmp.lt.s32.totalorder %s22, 1
      %s2518 = scalar_select %p2517, %s22, 1
      %p2519 = scmp.lt.s32.totalorder %s2516, 15
      %s2520 = scalar_select %p2519, %s2516, 15
      %s2521 = smul.addr %s2520, 2
      %s2522 = smul.addr %s2518, 32
      %s2523 = sadd.s32 %s2521, %s2522
      %s2524 = smul.addr %s2523, 8
      %s2525 = scalar_lea.vmem %s7, %s2524
      // Predicated region
      $region49: #{upsample_forward.1} parent=47 // pred_check
        %p2526 = pneg %p234
      $region50: #{upsample_forward.1} parent=47 // pred_check_branch
        %2528 = sbr.rel (%p2526) target = $region52
      $region51: #{upsample_forward.1} parent=47 // pred_region
        %s2529 = smul.u32 16, %s23
      $region52: #{upsample_forward.1} parent=47 // pred_fallthru
        _
    $region48: #{upsample_forward.1} parent=5 // pred_fallthru
      _
    %p2530 = scmp.le.s32.totalorder 2, %s13
    // Predicated region
    $region53: #{upsample_forward.1} parent=5 // pred_check
      %p2531 = pneg %p2530
    $region54: #{upsample_forward.1} parent=5 // pred_check_branch
      %2533 = sbr.rel (%p2531) target = $region56
    $region55: #{upsample_forward.1} parent=5 // pred_region
      %s2534 = ssub.s32 %s13, 2
      // Predicated region
      $region57: #{upsample_forward.1} parent=55 // pred_check
        %p2535 = pneg %p240
      $region58: #{upsample_forward.1} parent=55 // pred_check_branch
        %2537 = sbr.rel (%p2535) target = $region60
      $region59: #{upsample_forward.1} parent=55 // pred_region
        %s2538 = smul.u32 16, %s25
        %p2539 = scmp.lt.s32.totalorder %s24, 1
        %s2540 = scalar_select %p2539, %s24, 1
        %p2541 = scmp.lt.s32.totalorder %s2538, 15
        %s2542 = scalar_select %p2541, %s2538, 15
        %s2543 = smul.addr %s2542, 2
        %s2544 = smul.addr %s2540, 32
        %s2545 = sadd.s32 %s2543, %s2544
        %s2546 = smul.addr %s2545, 8
        %s2547 = scalar_lea.vmem %s7, %s2546
      $region60: #{upsample_forward.1} parent=55 // pred_fallthru
        _
    $region56: #{upsample_forward.1} parent=5 // pred_fallthru
      _
  $region6: #{upsample_forward.1} parent=0 // loop_footer
    %s17 = sadd.s32 1, %s13
  $region7: #{upsample_forward.1} parent=0 // loop_footer_branch
    %12 = sbr.rel target = $region3
  $region8: #{upsample_forward.1} parent=0 // loop_exit
    _

</llo_original>
